<compile_context>
chip_gen: v7x
topology: tpu7x:2x2x1
jax: 0.10.0
libtpu: 0.0.40
codegen_flags: <defaults>
</compile_context>

<pallas_src>
import functools

import jax
import jax.numpy as jnp
from jax.experimental import pallas as pl
from jax.experimental.pallas import tpu as pltpu


# ---------------------------------------------------------------------------
# VMEM sizing helpers
# ---------------------------------------------------------------------------
def _vmem_limit_bytes():
    """~75% of per-core VMEM: ~96 MiB on 128-MiB parts, ~48 MiB on v7x."""
    cap = None
    try:
        info = pltpu.get_tpu_info()
        for attr in ("vmem_capacity_bytes", "vmem_size_bytes", "vmem_bytes"):
            val = getattr(info, attr, None)
            if val:
                cap = int(val)
                break
    except Exception:
        cap = None
    if cap is None:
        try:
            kind = jax.devices()[0].device_kind.lower()
        except Exception:
            kind = ""
        if "v7" in kind or "7x" in kind:
            cap = 64 * 1024 * 1024
        elif any(t in kind for t in ("v4", "v5", "v6")):
            cap = 128 * 1024 * 1024
        else:
            cap = 64 * 1024 * 1024          # conservative default
    return (cap * 3) // 4


def _footprint_bytes(Nb, TH, *, HO, WO, Hp, Wp, Cin, Cout, KH, KW, stride,
                     dilation, itemsize):
    """Everything live in VMEM for one grid step (both kernel variants)."""
    h_need = Hp if TH == HO else (TH - 1) * stride + (KH - 1) * dilation + 1
    lanes = Nb * TH * WO
    inp = 2 * Nb * Cin * h_need * Wp * itemsize     # double-buffered input window
    patches = KH * KW * Cin * lanes * itemsize      # im2col scratch
    result = Cout * lanes * 4                       # f32 matmul result (vregs/spill)
    out = 2 * Nb * Cout * TH * WO * itemsize        # double-buffered output block
    wgt = 2 * Cout * KH * KW * Cin * itemsize       # double-buffered fused weight
    return inp + patches + result + out + wgt


def _choose_tiles(N, HO, WO, *, Hp, Wp, Cin, Cout, KH, KW, stride, dilation,
                  itemsize, budget):
    """Pick (Nb, TH) maximizing the matmul lane dim Nb*TH*WO under `budget`."""
    # Keep >= 2 batch grid blocks whenever N >= 2 so v7x megacore has work.
    nb_cap = min(8, max(1, N // 2)) if N >= 2 else 1
    nbs = [d for d in range(nb_cap, 0, -1) if N % d == 0]
    ths = [t for t in range(HO, 0, -1)
           if HO % t == 0 and (t == HO or (t * WO) % 128 == 0)]
    best = None
    for nb in nbs:
        for th in ths:
            need = _footprint_bytes(nb, th, HO=HO, WO=WO, Hp=Hp, Wp=Wp,
                                    Cin=Cin, Cout=Cout, KH=KH, KW=KW,
                                    stride=stride, dilation=dilation,
                                    itemsize=itemsize)
            if need > budget:
                continue
            key = (nb * th * WO, th)         # widest lane-N, then fewest halos
            if best is None or key > best[0]:
                best = (key, nb, th)
    if best is None:
        return 1, ths[-1]                    # smallest legal tile (budget hint only)
    return best[1], best[2]


# ---------------------------------------------------------------------------
# Shared compute: im2col into a VMEM scratch + ONE MXU matmul per grid step
# ---------------------------------------------------------------------------
def _emit_block_compute(xw, w_ref, o_ref, patches_ref, *, KH, KW, TH, WO, Nb,
                        Cin, stride, dilation, precision):
    """xw: Ref view (Nb, Cin, H_win, Wp); o_ref: (Nb, Cout, TH*WO)."""
    thwo = TH * WO
    st = None if stride == 1 else stride
    # TODO(synk): stride > 1 uses lane-strided slices; DMA-side horizontal
    # decimation (strided copy into a pre-decimated window) would be cheaper.
    for n in range(Nb):                            # small static loop (Nb <= 8)
        for kh in range(KH):
            hs = pl.ds(kh * dilation, TH, st)
            for kw in range(KW):
                ws = pl.ds(kw * dilation, WO, st)
                t = kh * KW + kw
                tap = xw[n, :, hs, ws]             # (Cin, TH, WO): slice only
                patches_ref[pl.ds(t * Cin, Cin),
                            pl.ds(n * thwo, thwo)] = tap.reshape(Cin, thwo)
    # One matmul for the whole batch block: (Cout, K) x (K, Nb*TH*WO).
    res = jnp.dot(w_ref[...], patches_ref[...],
                  preferred_element_type=jnp.float32, precision=precision)
    for n in range(Nb):                            # lane-aligned result slices
        o_ref[n] = res[:, n * thwo:(n + 1) * thwo].astype(o_ref.dtype)


# ---------------------------------------------------------------------------
# Kernel variant A: full-height window, auto-pipelined input (nR == 1)
# ---------------------------------------------------------------------------
def _dwsep_fullimage_kernel(x_ref, w_ref, o_ref, patches_ref, *, KH, KW, TH,
                            WO, Nb, Cin, stride, dilation, precision):
    _emit_block_compute(x_ref, w_ref, o_ref, patches_ref, KH=KH, KW=KW, TH=TH,
                        WO=WO, Nb=Nb, Cin=Cin, stride=stride,
                        dilation=dilation, precision=precision)


# ---------------------------------------------------------------------------
# Kernel variant B: row-tiled with halo, manual double-buffered DMA (nR > 1)
# ---------------------------------------------------------------------------
def _dwsep_rowtile_kernel(x_hbm, w_ref, o_ref, xbuf, sem, patches_ref, *, KH,
                          KW, TH, WO, Nb, Cin, stride, dilation, H_win,
                          precision):
    b = pl.program_id(0)
    r = pl.program_id(1)
    n_r = pl.num_programs(1)
    slot = r % 2

    def _copy(row_block, slot_idx):
        row0 = row_block * (TH * stride)
        return pltpu.make_async_copy(
            x_hbm.at[pl.ds(b * Nb, Nb), :, pl.ds(row0, H_win), :],
            xbuf.at[slot_idx],
            sem.at[slot_idx])

    # Per batch-block prologue: only the first of nR windows is exposed.
    @pl.when(r == 0)
    def _():
        _copy(0, 0).start()

    _copy(r, slot).wait()

    # Prefetch the next row window while computing this one.
    @pl.when(r + 1 < n_r)
    def _():
        _copy(r + 1, 1 - slot).start()

    _emit_block_compute(xbuf.at[slot], w_ref, o_ref, patches_ref, KH=KH,
                        KW=KW, TH=TH, WO=WO, Nb=Nb, Cin=Cin, stride=stride,
                        dilation=dilation, precision=precision)


# ---------------------------------------------------------------------------
# Wrapper
# ---------------------------------------------------------------------------
def depthwise_separable_conv(x_nchw, w_dw, w_pw, *, stride=1, padding=0,
                             dilation=1, precision=None,
                             vmem_budget_bytes=None):
    """Matches DepthwiseSeparableConv.forward (bias=False).

    x_nchw : (N, Cin, H, W)
    w_dw   : (Cin, 1, KH, KW)   torch depthwise weight (groups=Cin)
    w_pw   : (Cout, Cin, 1, 1)  torch pointwise weight
    returns: (N, Cout, HO, WO)
    """
    if precision is None:
        precision = jax.lax.Precision.DEFAULT    # single-pass bf16 MXU passes

    N, Cin, H, W = x_nchw.shape
    Cout = int(w_pw.shape[0])
    KH, KW = int(w_dw.shape[2]), int(w_dw.shape[3])
    HO = (H + 2 * padding - dilation * (KH - 1) - 1) // stride + 1
    WO = (W + 2 * padding - dilation * (KW - 1) - 1) // stride + 1

    # Stay NCHW end to end: only zero-pad spatially (no layout transposes).
    x = jnp.pad(x_nchw, ((0, 0), (0, 0),
                         (padding, padding), (padding, padding)))
    Hp, Wp = x.shape[2], x.shape[3]

    # Fuse depthwise and pointwise weights into one (Cout, KH*KW*Cin) matrix,
    # tap-major to match the im2col row order used in the kernel.
    wdw_taps = jnp.transpose(w_dw[:, 0, :, :], (1, 2, 0)).reshape(KH * KW, Cin)
    wpw_mat = w_pw[:, :, 0, 0]                                   # (Cout, Cin)
    w_eff = (wpw_mat[:, None, :] * wdw_taps[None, :, :]).reshape(
        Cout, KH * KW * Cin).astype(x.dtype)
    K = KH * KW * Cin

    itemsize = jnp.dtype(x.dtype).itemsize
    vmem_limit = _vmem_limit_bytes()
    budget = (vmem_budget_bytes if vmem_budget_bytes is not None
              else vmem_limit - 4 * 1024 * 1024)   # headroom for Pallas internals
    Nb, TH = _choose_tiles(N, HO, WO, Hp=Hp, Wp=Wp, Cin=Cin, Cout=Cout, KH=KH,
                           KW=KW, stride=stride, dilation=dilation,
                           itemsize=itemsize, budget=budget)
    nB, nR = N // Nb, HO // TH
    out_shape = jax.ShapeDtypeStruct((N, Cout, HO * WO), x_nchw.dtype)
    common = dict(KH=KH, KW=KW, TH=TH, WO=WO, Nb=Nb, Cin=Cin, stride=stride,
                  dilation=dilation, precision=precision)

    if nR == 1:
        # No halo: plain auto-pipelined BlockSpec over the batch axis, so the
        # input DMA for block b+1 overlaps the compute of block b.
        kernel = functools.partial(_dwsep_fullimage_kernel, **common)
        grid_spec = pltpu.PrefetchScalarGridSpec(
            num_scalar_prefetch=0,
            grid=(nB,),
            in_specs=[
                pl.BlockSpec((Nb, Cin, Hp, Wp), lambda b: (b, 0, 0, 0)),
                pl.BlockSpec((Cout, K), lambda b: (0, 0)),
            ],
            out_specs=pl.BlockSpec((Nb, Cout, TH * WO), lambda b: (b, 0, 0)),
            scratch_shapes=[pltpu.VMEM((K, Nb * TH * WO), x.dtype)])
        dims = ("parallel",)
        # TODO(synk): when N == 1 (nB == 1) the second v7x TensorCore is idle;
        # a row-split parallel axis would recover it for single images.
    else:
        # Overlapping row windows (halo) -> input stays in HBM, manual
        # double-buffered DMA per row window.
        H_win = (TH - 1) * stride + (KH - 1) * dilation + 1
        kernel = functools.partial(_dwsep_rowtile_kernel, H_win=H_win, **common)
        grid_spec = pltpu.PrefetchScalarGridSpec(
            num_scalar_prefetch=0,
            grid=(nB, nR),
            in_specs=[
                pl.BlockSpec(memory_space=pl.ANY),          # input stays in HBM
                pl.BlockSpec((Cout, K), lambda b, r: (0, 0)),
            ],
            out_specs=pl.BlockSpec((Nb, Cout, TH * WO), lambda b, r: (b, 0, r)),
            scratch_shapes=[
                pltpu.VMEM((2, Nb, Cin, H_win, Wp), x.dtype),
                pltpu.SemaphoreType.DMA((2,)),
                pltpu.VMEM((K, Nb * TH * WO), x.dtype),
            ])
        dims = ("parallel", "arbitrary")

    out_flat = pl.pallas_call(
        kernel,
        out_shape=out_shape,
        grid_spec=grid_spec,
        compiler_params=pltpu.CompilerParams(
            dimension_semantics=dims,
            vmem_limit_bytes=vmem_limit),
    )(x, w_eff)

    # Contiguous reshape back to NCHW spatial (layout plumbing, not a transpose).
    return out_flat.reshape(N, Cout, HO, WO)


# ---------------------------------------------------------------------------
# Pure-JAX reference (mirrors the PyTorch module)
# ---------------------------------------------------------------------------
def _reference(x_nchw, w_dw, w_pw, *, stride=1, padding=0, dilation=1):
    Cin = x_nchw.shape[1]
    prec = jax.lax.Precision.HIGHEST
    dw = jax.lax.conv_general_dilated(
        x_nchw, w_dw, window_strides=(stride, stride),
        padding=((padding, padding), (padding, padding)),
        rhs_dilation=(dilation, dilation),
        dimension_numbers=("NCHW", "OIHW", "NCHW"),
        feature_group_count=Cin, precision=prec)
    return jax.lax.conv_general_dilated(
        dw, w_pw, window_strides=(1, 1), padding="VALID",
        dimension_numbers=("NCHW", "OIHW", "NCHW"), precision=prec)


if __name__ == "__main__":
    # Deterministic config matching the module: batch=2, in_channels=4,
    # out_channels=8, spatial=16x16, kernel_size=3, stride=1, padding=1,
    # dilation=1, bias=False.
    N, CIN, COUT, H, W, KSZ = 2, 4, 8, 16, 16, 3
    stride, padding, dilation = 1, 1, 1

    key = jax.random.PRNGKey(0)
    kx, kd, kp = jax.random.split(key, 3)
    x = jax.random.normal(kx, (N, CIN, H, W), dtype=jnp.float32)
    w_dw = jax.random.normal(kd, (CIN, 1, KSZ, KSZ), dtype=jnp.float32) * 0.1
    w_pw = jax.random.normal(kp, (COUT, CIN, 1, 1), dtype=jnp.float32) * 0.1

    ref = _reference(x, w_dw, w_pw, stride=stride, padding=padding,
                     dilation=dilation)

    # 1) Full-height (auto-pipelined) path, f32-exact MXU passes.
    out_auto = depthwise_separable_conv(
        x, w_dw, w_pw, stride=stride, padding=padding, dilation=dilation,
        precision=jax.lax.Precision.HIGHEST)
    out_auto = jax.block_until_ready(out_auto)
    assert out_auto.shape == ref.shape == (N, COUT, H, W)
    assert jnp.allclose(out_auto, ref, atol=1e-4, rtol=1e-4)

    # 2) Row-tiled (manual halo-DMA) path, forced via a tiny tile budget.
    out_tiled = depthwise_separable_conv(
        x, w_dw, w_pw, stride=stride, padding=padding, dilation=dilation,
        precision=jax.lax.Precision.HIGHEST, vmem_budget_bytes=48 * 1024)
    out_tiled = jax.block_until_ready(out_tiled)
    assert jnp.allclose(out_tiled, ref, atol=1e-4, rtol=1e-4)

    # 3) Default (fast) precision: single-pass bf16 MXU, looser tolerance.
    out_fast = depthwise_separable_conv(
        x, w_dw, w_pw, stride=stride, padding=padding, dilation=dilation)
    out_fast = jax.block_until_ready(out_fast)
    assert jnp.allclose(out_fast, ref, atol=1e-2, rtol=1e-2)

    print("KERNEL_OK")
</pallas_src>

<mosaic_0001>
module attributes {stable_mosaic.version = 11 : i64} {
  func.func @_dwsep_fullimage_kernel(%arg0: i32, %arg1: memref<1x4x18x18xf32, #tpu.memory_space<vmem>>, %arg2: memref<8x36xf32, #tpu.memory_space<vmem>>, %arg3: memref<1x8x256xf32, #tpu.memory_space<vmem>>, %arg4: memref<36x256xf32, #tpu.memory_space<vmem>>) attributes {dimension_semantics = [#tpu.dimension_semantics<parallel>], iteration_bounds = array<i64: 2>, scalar_prefetch = 0 : i64, scratch_operands = 1 : i64, tpu.core_type = #tpu.core_type<tc>, window_params = [{transform_indices = @transform_0, window_bounds = array<i64: 1, 4, 18, 18>}, {pipeline_mode = #tpu.pipeline_mode<synchronous>, transform_indices = @transform_1, window_bounds = array<i64: 8, 36>}, {transform_indices = @transform_2, window_bounds = array<i64: 1, 8, 256>}]} {
    %c0 = arith.constant 0 : index
    %c0_0 = arith.constant 0 : index
    %c0_1 = arith.constant 0 : index
    %c0_2 = arith.constant 0 : index
    %0 = vector.load %arg1[%c0, %c0_0, %c0_1, %c0_2] : memref<1x4x18x18xf32, #tpu.memory_space<vmem>>, vector<1x4x16x16xf32>
    %1 = vector.shape_cast %0 : vector<1x4x16x16xf32> to vector<4x16x16xf32>
    %2 = vector.shape_cast %1 : vector<4x16x16xf32> to vector<4x256xf32>
    %c0_3 = arith.constant 0 : index
    %c0_4 = arith.constant 0 : index
    %3 = vector.load %arg4[%c0_3, %c0_4] : memref<36x256xf32, #tpu.memory_space<vmem>>, vector<4x256xf32>
    tpu.vector_store %arg4[%c0_3, %c0_4], %2 {strides = array<i32>} : memref<36x256xf32, #tpu.memory_space<vmem>>, vector<4x256xf32>,
    %c0_5 = arith.constant 0 : index
    %c0_6 = arith.constant 0 : index
    %c0_7 = arith.constant 0 : index
    %c1 = arith.constant 1 : index
    %4 = vector.load %arg1[%c0_5, %c0_6, %c0_7, %c1] : memref<1x4x18x18xf32, #tpu.memory_space<vmem>>, vector<1x4x16x16xf32>
    %5 = vector.shape_cast %4 : vector<1x4x16x16xf32> to vector<4x16x16xf32>
    %6 = vector.shape_cast %5 : vector<4x16x16xf32> to vector<4x256xf32>
    %c4 = arith.constant 4 : index
    %c0_8 = arith.constant 0 : index
    %7 = vector.load %arg4[%c4, %c0_8] : memref<36x256xf32, #tpu.memory_space<vmem>>, vector<4x256xf32>
    tpu.vector_store %arg4[%c4, %c0_8], %6 {strides = array<i32>} : memref<36x256xf32, #tpu.memory_space<vmem>>, vector<4x256xf32>,
    %c0_9 = arith.constant 0 : index
    %c0_10 = arith.constant 0 : index
    %c0_11 = arith.constant 0 : index
    %c2 = arith.constant 2 : index
    %8 = vector.load %arg1[%c0_9, %c0_10, %c0_11, %c2] : memref<1x4x18x18xf32, #tpu.memory_space<vmem>>, vector<1x4x16x16xf32>
    %9 = vector.shape_cast %8 : vector<1x4x16x16xf32> to vector<4x16x16xf32>
    %10 = vector.shape_cast %9 : vector<4x16x16xf32> to vector<4x256xf32>
    %c8 = arith.constant 8 : index
    %c0_12 = arith.constant 0 : index
    %11 = vector.load %arg4[%c8, %c0_12] : memref<36x256xf32, #tpu.memory_space<vmem>>, vector<4x256xf32>
    tpu.vector_store %arg4[%c8, %c0_12], %10 {strides = array<i32>} : memref<36x256xf32, #tpu.memory_space<vmem>>, vector<4x256xf32>,
    %c0_13 = arith.constant 0 : index
    %c0_14 = arith.constant 0 : index
    %c1_15 = arith.constant 1 : index
    %c0_16 = arith.constant 0 : index
    %12 = vector.load %arg1[%c0_13, %c0_14, %c1_15, %c0_16] : memref<1x4x18x18xf32, #tpu.memory_space<vmem>>, vector<1x4x16x16xf32>
    %13 = vector.shape_cast %12 : vector<1x4x16x16xf32> to vector<4x16x16xf32>
    %14 = vector.shape_cast %13 : vector<4x16x16xf32> to vector<4x256xf32>
    %c12 = arith.constant 12 : index
    %c0_17 = arith.constant 0 : index
    %15 = vector.load %arg4[%c12, %c0_17] : memref<36x256xf32, #tpu.memory_space<vmem>>, vector<4x256xf32>
    tpu.vector_store %arg4[%c12, %c0_17], %14 {strides = array<i32>} : memref<36x256xf32, #tpu.memory_space<vmem>>, vector<4x256xf32>,
    %c0_18 = arith.constant 0 : index
    %c0_19 = arith.constant 0 : index
    %c1_20 = arith.constant 1 : index
    %c1_21 = arith.constant 1 : index
    %16 = vector.load %arg1[%c0_18, %c0_19, %c1_20, %c1_21] : memref<1x4x18x18xf32, #tpu.memory_space<vmem>>, vector<1x4x16x16xf32>
    %17 = vector.shape_cast %16 : vector<1x4x16x16xf32> to vector<4x16x16xf32>
    %18 = vector.shape_cast %17 : vector<4x16x16xf32> to vector<4x256xf32>
    %c16 = arith.constant 16 : index
    %c0_22 = arith.constant 0 : index
    %19 = vector.load %arg4[%c16, %c0_22] : memref<36x256xf32, #tpu.memory_space<vmem>>, vector<4x256xf32>
    tpu.vector_store %arg4[%c16, %c0_22], %18 {strides = array<i32>} : memref<36x256xf32, #tpu.memory_space<vmem>>, vector<4x256xf32>,
    %c0_23 = arith.constant 0 : index
    %c0_24 = arith.constant 0 : index
    %c1_25 = arith.constant 1 : index
    %c2_26 = arith.constant 2 : index
    %20 = vector.load %arg1[%c0_23, %c0_24, %c1_25, %c2_26] : memref<1x4x18x18xf32, #tpu.memory_space<vmem>>, vector<1x4x16x16xf32>
    %21 = vector.shape_cast %20 : vector<1x4x16x16xf32> to vector<4x16x16xf32>
    %22 = vector.shape_cast %21 : vector<4x16x16xf32> to vector<4x256xf32>
    %c20 = arith.constant 20 : index
    %c0_27 = arith.constant 0 : index
    %23 = vector.load %arg4[%c20, %c0_27] : memref<36x256xf32, #tpu.memory_space<vmem>>, vector<4x256xf32>
    tpu.vector_store %arg4[%c20, %c0_27], %22 {strides = array<i32>} : memref<36x256xf32, #tpu.memory_space<vmem>>, vector<4x256xf32>,
    %c0_28 = arith.constant 0 : index
    %c0_29 = arith.constant 0 : index
    %c2_30 = arith.constant 2 : index
    %c0_31 = arith.constant 0 : index
    %24 = vector.load %arg1[%c0_28, %c0_29, %c2_30, %c0_31] : memref<1x4x18x18xf32, #tpu.memory_space<vmem>>, vector<1x4x16x16xf32>
    %25 = vector.shape_cast %24 : vector<1x4x16x16xf32> to vector<4x16x16xf32>
    %26 = vector.shape_cast %25 : vector<4x16x16xf32> to vector<4x256xf32>
    %c24 = arith.constant 24 : index
    %c0_32 = arith.constant 0 : index
    %27 = vector.load %arg4[%c24, %c0_32] : memref<36x256xf32, #tpu.memory_space<vmem>>, vector<4x256xf32>
    tpu.vector_store %arg4[%c24, %c0_32], %26 {strides = array<i32>} : memref<36x256xf32, #tpu.memory_space<vmem>>, vector<4x256xf32>,
    %c0_33 = arith.constant 0 : index
    %c0_34 = arith.constant 0 : index
    %c2_35 = arith.constant 2 : index
    %c1_36 = arith.constant 1 : index
    %28 = vector.load %arg1[%c0_33, %c0_34, %c2_35, %c1_36] : memref<1x4x18x18xf32, #tpu.memory_space<vmem>>, vector<1x4x16x16xf32>
    %29 = vector.shape_cast %28 : vector<1x4x16x16xf32> to vector<4x16x16xf32>
    %30 = vector.shape_cast %29 : vector<4x16x16xf32> to vector<4x256xf32>
    %c28 = arith.constant 28 : index
    %c0_37 = arith.constant 0 : index
    %31 = vector.load %arg4[%c28, %c0_37] : memref<36x256xf32, #tpu.memory_space<vmem>>, vector<4x256xf32>
    tpu.vector_store %arg4[%c28, %c0_37], %30 {strides = array<i32>} : memref<36x256xf32, #tpu.memory_space<vmem>>, vector<4x256xf32>,
    %c0_38 = arith.constant 0 : index
    %c0_39 = arith.constant 0 : index
    %c2_40 = arith.constant 2 : index
    %c2_41 = arith.constant 2 : index
    %32 = vector.load %arg1[%c0_38, %c0_39, %c2_40, %c2_41] : memref<1x4x18x18xf32, #tpu.memory_space<vmem>>, vector<1x4x16x16xf32>
    %33 = vector.shape_cast %32 : vector<1x4x16x16xf32> to vector<4x16x16xf32>
    %34 = vector.shape_cast %33 : vector<4x16x16xf32> to vector<4x256xf32>
    %c32 = arith.constant 32 : index
    %c0_42 = arith.constant 0 : index
    %35 = vector.load %arg4[%c32, %c0_42] : memref<36x256xf32, #tpu.memory_space<vmem>>, vector<4x256xf32>
    tpu.vector_store %arg4[%c32, %c0_42], %34 {strides = array<i32>} : memref<36x256xf32, #tpu.memory_space<vmem>>, vector<4x256xf32>,
    %c0_43 = arith.constant 0 : index
    %c0_44 = arith.constant 0 : index
    %36 = vector.load %arg2[%c0_43, %c0_44] : memref<8x36xf32, #tpu.memory_space<vmem>>, vector<8x36xf32>
    %c0_45 = arith.constant 0 : index
    %c0_46 = arith.constant 0 : index
    %37 = vector.load %arg4[%c0_45, %c0_46] : memref<36x256xf32, #tpu.memory_space<vmem>>, vector<36x256xf32>
    %cst = arith.constant dense<0.000000e+00> : vector<8x256xf32>
    %38 = tpu.matmul %36, %37, %cst {dimension_numbers = #tpu.dot_dimension_numbers<[1], [0], [0], [1], [0, 0, 1, 1], [], []>, precision = #tpu.contract_precision<fp32>} : vector<8x36xf32>, vector<36x256xf32>, vector<8x256xf32> -> vector<8x256xf32>
    %c0_47 = arith.constant 0 : index
    %c0_48 = arith.constant 0 : index
    %c0_49 = arith.constant 0 : index
    %39 = vector.load %arg3[%c0_47, %c0_48, %c0_49] : memref<1x8x256xf32, #tpu.memory_space<vmem>>, vector<1x8x256xf32>
    %40 = vector.shape_cast %39 : vector<1x8x256xf32> to vector<8x256xf32>
    %41 = vector.shape_cast %38 : vector<8x256xf32> to vector<1x8x256xf32>
    tpu.vector_store %arg3[%c0_47, %c0_48, %c0_49], %41 {strides = array<i32>} : memref<1x8x256xf32, #tpu.memory_space<vmem>>, vector<1x8x256xf32>,
    return
  }
  func.func @transform_0(%arg0: i32) -> (i32, i32, i32, i32) {
    %c0_i32 = arith.constant 0 : i32
    %c0_i32_0 = arith.constant 0 : i32
    %c0_i32_1 = arith.constant 0 : i32
    %c0_i32_2 = arith.constant 0 : i32
    return %arg0, %c0_i32, %c0_i32_0, %c0_i32_1 : i32, i32, i32, i32
  }
  func.func @transform_1(%arg0: i32) -> (i32, i32) {
    %c0_i32 = arith.constant 0 : i32
    %c0_i32_0 = arith.constant 0 : i32
    %c0_i32_1 = arith.constant 0 : i32
    return %c0_i32, %c0_i32_0 : i32, i32
  }
  func.func @transform_2(%arg0: i32) -> (i32, i32, i32) {
    %c0_i32 = arith.constant 0 : i32
    %c0_i32_0 = arith.constant 0 : i32
    %c0_i32_1 = arith.constant 0 : i32
    return %arg0, %c0_i32, %c0_i32_0 : i32, i32, i32
  }
}

</mosaic_0001>

<llo_original>
// kernel: tpu_custom_call.1
$region0: #{tpu_custom_call.1}
  #allocation0 [shape = 'u32[]', space=smem, size = 0x4, offset = 0x4, fixed_abs, tag = 'smem constant byte address 0x4 - core index']
  #allocation1 [shape = 'u32[144,128]{1,0:T(1,128)}', space=vmem, size = 0x12000, scoped, tag = 'internal scratch']
  #allocation2 [shape = 'f32[36,256]{1,0:T(8,128)}', space=vmem, size = 0xa000, scoped, tag = 'scratch operand']
  %s0 = inlined_call_operand.vmem [shape: f32[2,4,18,18], index: 0, kind: input, shape index: {}]
  %s1 = inlined_call_operand.vmem [shape: f32[8,36], index: 1, kind: input, shape index: {}]
  %s2 = inlined_call_operand.hbm [shape: f32[2,8,256], index: 2, kind: output, shape index: {}]
  %s3 = sld [smem:[#allocation0]]
  $region41: #{tpu_custom_call.1} parent=0
    _
  %s5 = ssub.s32 1, %s3
  %s6 = scalar_select 0, %s5, %s3
  $region1: #{tpu_custom_call.1} parent=0
    #allocation3 [shape = 'u8[16384]{0}', space=vmem, size = 0x4000, scoped, tag = 'output window, operand 0']
    #allocation4 [shape = 's32[2]{0}', space=sflag, size = 0x8, scoped, tag = 'scoped memory for tpu_custom_call.1']
    %7 = vsyncpa [#allocation4], 0
    %s8 = scalar_lea.sflag [#allocation4], 1
    %9 = vsyncpa %s8, 0
    loop: start=0, step=1, limit=4
    $region2: #{tpu_custom_call.1} parent=1 // loop_pre_header
      _
    $region3: #{tpu_custom_call.1} parent=1 // loop_header
      %s11 = sphi 0, %s15
      %p12 = scmp.ge.s32.totalorder %s11, 4
      %s21 = sphi 0, %s23
      %s24 = sphi 0, %s21
      %s25 = sphi 0, %s24
      %s41 = sphi 0, %s25
      %s45 = sphi 0, %s45
      %s47 = sphi 0, %s45
      %s48 = sphi 0, %s47
      %s62 = sphi 0, %s48
      %s68 = sphi 0, %s70
      %s71 = sphi 0, %s68
      %s72 = sphi 0, %s71
      %s88 = sphi 0, %s72
    $region4: #{tpu_custom_call.1} parent=1 // loop_header_branch
      %14 = sbr.rel (%p12) target = $region8
    $region5: #{tpu_custom_call.1} parent=1 // loop_body
      %s16 = ssub.s32 %s11, 1
      %s17 = ssub.s32 %s11, 2
      %s18 = sadd.s32 %s11, 1
      %s19 = ssub.s32 %s11, %s18
      %p20 = scmp.eq.s32.totalorder %s19, 0
      %s22 = sadd.s32 %s21, 1
      %s23 = scalar_select %p20, %s21, %s22
      %p26 = pneg %p20
      %p27 = scmp.eq.s32.totalorder %s11, 1
      %p28 = por %p26, %p27
      %p29 = scmp.ne.s32.totalorder %s21, %s24
      %p30 = scmp.eq.s32.totalorder %s11, 0
      %p31 = por %p29, %p30
      %p32 = scmp.ne.s32.totalorder %s21, %s24
      %p33 = scmp.eq.s32.totalorder %s16, 1
      %p34 = por %p32, %p33
      %p35 = scmp.ne.s32.totalorder %s24, %s25
      %p36 = scmp.eq.s32.totalorder %s16, 0
      %p37 = por %p35, %p36
      %p38 = scmp.ne.s32.totalorder %s24, %s25
      %p39 = scmp.eq.s32.totalorder %s17, 1
      %p40 = por %p38, %p39
      %p42 = scmp.ne.s32.totalorder %s25, %s41
      %p43 = scmp.eq.s32.totalorder %s17, 0
      %p44 = por %p42, %p43
      %s46 = sadd.s32 %s45, 1
      %p49 = scmp.eq.s32.totalorder %s11, 1
      %p50 = scmp.ne.s32.totalorder %s45, %s47
      %p51 = scmp.eq.s32.totalorder %s11, 0
      %p52 = por %p50, %p51
      %p53 = scmp.ne.s32.totalorder %s45, %s47
      %p54 = scmp.eq.s32.totalorder %s16, 1
      %p55 = por %p53, %p54
      %p56 = scmp.ne.s32.totalorder %s47, %s48
      %p57 = scmp.eq.s32.totalorder %s16, 0
      %p58 = por %p56, %p57
      %p59 = scmp.ne.s32.totalorder %s47, %s48
      %p60 = scmp.eq.s32.totalorder %s17, 1
      %p61 = por %p59, %p60
      %p63 = scmp.ne.s32.totalorder %s48, %s62
      %p64 = scmp.eq.s32.totalorder %s17, 0
      %p65 = por %p63, %p64
      %s66 = ssub.s32 %s11, %s18
      %p67 = scmp.eq.s32.totalorder %s66, 0
      %s69 = sadd.s32 %s68, 1
      %s70 = scalar_select %p67, %s68, %s69
      %p73 = pneg %p67
      %p74 = scmp.eq.s32.totalorder %s11, 1
      %p75 = por %p73, %p74
      %p76 = scmp.ne.s32.totalorder %s68, %s71
      %p77 = scmp.eq.s32.totalorder %s11, 0
      %p78 = por %p76, %p77
      %p79 = scmp.ne.s32.totalorder %s68, %s71
      %p80 = scmp.eq.s32.totalorder %s16, 1
      %p81 = por %p79, %p80
      %p82 = scmp.ne.s32.totalorder %s71, %s72
      %p83 = scmp.eq.s32.totalorder %s16, 0
      %p84 = por %p82, %p83
      %p85 = scmp.ne.s32.totalorder %s71, %s72
      %p86 = scmp.eq.s32.totalorder %s17, 1
      %p87 = por %p85, %p86
      %p89 = scmp.ne.s32.totalorder %s72, %s88
      %p90 = scmp.eq.s32.totalorder %s17, 0
      %p91 = por %p89, %p90
      %p92 = scmp.le.s32.totalorder 1, %s11
      %p93 = scmp.lt.s32.totalorder %s11, 3
      %p94 = pnand %p92, %p93
      %p95 = pneg %p94
      // Predicated region
      $region9: #{tpu_custom_call.1} parent=5 // pred_check
        _
      $region10: #{tpu_custom_call.1} parent=5 // pred_check_branch
        %97 = sbr.rel (%p94) target = $region12
      $region11: #{tpu_custom_call.1} parent=5 // pred_region
        %s98 = ssub.s32 %s11, 1
        // Predicated region
        $region13: #{tpu_custom_call.1} parent=11 // pred_check
          %p99 = pneg %p58
        $region14: #{tpu_custom_call.1} parent=11 // pred_check_branch
          %101 = sbr.rel (%p99) target = $region16
        $region15: #{tpu_custom_call.1} parent=11 // pred_region
          _
        $region16: #{tpu_custom_call.1} parent=11 // pred_fallthru
          _
      $region12: #{tpu_custom_call.1} parent=5 // pred_fallthru
        _
      %p102 = scmp.lt.s32.totalorder %s11, 2
      // Predicated region
      $region17: #{tpu_custom_call.1} parent=5 // pred_check
        %p103 = pneg %p102
      $region18: #{tpu_custom_call.1} parent=5 // pred_check_branch
        %105 = sbr.rel (%p103) target = $region20
      $region19: #{tpu_custom_call.1} parent=5 // pred_region
        // Predicated region
        $region21: #{tpu_custom_call.1} parent=19 // pred_check
          %p106 = pneg %p31
        $region22: #{tpu_custom_call.1} parent=19 // pred_check_branch
          %108 = sbr.rel (%p106) target = $region24
        $region23: #{tpu_custom_call.1} parent=19 // pred_region
          %p109 = scmp.lt.s32.totalorder %s11, 1
          %s110 = scalar_select %p109, %s11, 1
          %s111 = smul.addr %s110, 12
          %s112 = smul.addr %s111, 8
          %s113 = scalar_lea.vmem %s0, %s112
        $region24: #{tpu_custom_call.1} parent=19 // pred_fallthru
          _
      $region20: #{tpu_custom_call.1} parent=5 // pred_fallthru
        _
      %p114 = scmp.le.s32.totalorder 1, %s11
      %p115 = scmp.lt.s32.totalorder %s11, 3
      %p116 = pnand %p114, %p115
      %p117 = pneg %p116
      // Predicated region
      $region25: #{tpu_custom_call.1} parent=5 // pred_check
        _
      $region26: #{tpu_custom_call.1} parent=5 // pred_check_branch
        %119 = sbr.rel (%p116) target = $region28
      $region27: #{tpu_custom_call.1} parent=5 // pred_region
        %s120 = ssub.s32 %s11, 1
        %p121 = scmp.lt.s32.totalorder %s16, 1
        %s122 = scalar_select %p121, %s16, 1
        %s123 = smul.addr %s122, 12
        %s124 = smul.addr %s123, 8
        %s125 = scalar_lea.vmem %s0, %s124
        %p126 = pneg %p37
        %p127 = pneg %p34
        %p128 = pneg %p58
        %p129 = pneg %p55
        %p130 = pneg %p84
        %p131 = pneg %p81
        %s132 = sand.u32 %s71, 1
        %s133 = scalar_lea.sflag [#allocation4], %s132
        %s134 = sand.u32 %s71, 1
        %s135 = smul.addr %s134, 16
        %s136 = scalar_lea.vmem [#allocation3], %s135
        %p137 = scmp.lt.s32.totalorder %s16, 1
        %s138 = scalar_select %p137, %s16, 1
        %s139 = smul.addr %s138, 12
        %s140 = smul.addr %s139, 8
        %s141 = scalar_lea.vmem %s0, %s140
        %v142 = vld [vmem:[%s141] sm:$0xff]
        %v143 = vld [vmem:[%s141 + $0x8] sm:$0xff]
        %v144 = vld [vmem:[%s141 + $0x18] sm:$0xff]
        %v145 = vld [vmem:[%s141 + $0x20] sm:$0xff]
        %v146 = vld [vmem:[%s141 + $0x30] sm:$0xff]
        %v147 = vld [vmem:[%s141 + $0x38] sm:$0xff]
        %v148 = vld [vmem:[%s141 + $0x48] sm:$0xff]
        %v149 = vld [vmem:[%s141 + $0x50] sm:$0xff]
        %v150 = vcombine.low %v142, %v146
        %v151 = vcombine.high %v142, %v146
        %v153 = vunpack.c.l.s4 1983009808
        %v154 = vunpack.c.0.s8 %v153
        %v155 = vlaneseq
        %v156 = vshrl.u32 %v155, 7
        %v157 = vsub.s32 %v154, %v156
        %v158 = vrot.slane %v150, %v157
        %v160 = vunpack.c.l.s4 1983009808
        %v161 = vunpack.c.0.s8 %v160
        %v162 = vlaneseq
        %v163 = vshrl.u32 %v162, 7
        %v164 = vsub.s32 %v161, %v163
        %v165 = vrot.slane %v151, %v164
        %v166 = vcombine.low %v144, %v148
        %v167 = vcombine.high %v144, %v148
        %v169 = vunpack.c.l.s4 1983009808
        %v170 = vunpack.c.0.s8 %v169
        %v171 = vlaneseq
        %v172 = vshrl.u32 %v171, 7
        %v173 = vsub.s32 %v170, %v172
        %v174 = vrot.slane %v166, %v173
        %v176 = vunpack.c.l.s4 1983009808
        %v177 = vunpack.c.0.s8 %v176
        %v178 = vlaneseq
        %v179 = vshrl.u32 %v178, 7
        %v180 = vsub.s32 %v177, %v179
        %v181 = vrot.slane %v167, %v180
        %v182 = vcombine.low %v158, %v174
        %v183 = vcombine.high %v158, %v174
        %v185 = vunpack.c.l.s4 1934713408
        %v186 = vunpack.c.0.s8 %v185
        %v187 = vlaneseq
        %v188 = vshrl.u32 %v187, 7
        %v189 = vsub.s32 %v186, %v188
        %v190 = vrot.slane %v182, %v189
        %v192 = vunpack.c.l.s4 1934713408
        %v193 = vunpack.c.0.s8 %v192
        %v194 = vlaneseq
        %v195 = vshrl.u32 %v194, 7
        %v196 = vsub.s32 %v193, %v195
        %v197 = vrot.slane %v183, %v196
        %v198 = vcombine.low %v165, %v181
        %v199 = vcombine.high %v165, %v181
        %v201 = vunpack.c.l.s4 1934713408
        %v202 = vunpack.c.0.s8 %v201
        %v203 = vlaneseq
        %v204 = vshrl.u32 %v203, 7
        %v205 = vsub.s32 %v202, %v204
        %v206 = vrot.slane %v198, %v205
        %v208 = vunpack.c.l.s4 1934713408
        %v209 = vunpack.c.0.s8 %v208
        %v210 = vlaneseq
        %v211 = vshrl.u32 %v210, 7
        %v212 = vsub.s32 %v209, %v211
        %v213 = vrot.slane %v199, %v212
        %v214 = vcombine.high %v190, 0.0
        %v215 = vcombine.high %v197, 0.0
        %v216 = vcombine.high %v206, 0.0
        %v217 = vcombine.high %v213, 0.0
        %v218 = vcombine.low %v143, %v147
        %v219 = vcombine.high %v143, %v147
        %v221 = vunpack.c.l.s4 1983009808
        %v222 = vunpack.c.0.s8 %v221
        %v223 = vlaneseq
        %v224 = vshrl.u32 %v223, 7
        %v225 = vsub.s32 %v222, %v224
        %v226 = vrot.slane %v218, %v225
        %v228 = vunpack.c.l.s4 1983009808
        %v229 = vunpack.c.0.s8 %v228
        %v230 = vlaneseq
        %v231 = vshrl.u32 %v230, 7
        %v232 = vsub.s32 %v229, %v231
        %v233 = vrot.slane %v219, %v232
        %v234 = vcombine.low %v145, %v149
        %v235 = vcombine.high %v145, %v149
        %v237 = vunpack.c.l.s4 1983009808
        %v238 = vunpack.c.0.s8 %v237
        %v239 = vlaneseq
        %v240 = vshrl.u32 %v239, 7
        %v241 = vsub.s32 %v238, %v240
        %v242 = vrot.slane %v234, %v241
        %v244 = vunpack.c.l.s4 1983009808
        %v245 = vunpack.c.0.s8 %v244
        %v246 = vlaneseq
        %v247 = vshrl.u32 %v246, 7
        %v248 = vsub.s32 %v245, %v247
        %v249 = vrot.slane %v235, %v248
        %v250 = vcombine.low %v226, %v242
        %v251 = vcombine.high %v226, %v242
        %v253 = vunpack.c.l.s4 1934713408
        %v254 = vunpack.c.0.s8 %v253
        %v255 = vlaneseq
        %v256 = vshrl.u32 %v255, 7
        %v257 = vsub.s32 %v254, %v256
        %v258 = vrot.slane %v250, %v257
        %v260 = vunpack.c.l.s4 1934713408
        %v261 = vunpack.c.0.s8 %v260
        %v262 = vlaneseq
        %v263 = vshrl.u32 %v262, 7
        %v264 = vsub.s32 %v261, %v263
        %v265 = vrot.slane %v251, %v264
        %v266 = vcombine.low %v233, %v249
        %v267 = vcombine.high %v233, %v249
        %v269 = vunpack.c.l.s4 1934713408
        %v270 = vunpack.c.0.s8 %v269
        %v271 = vlaneseq
        %v272 = vshrl.u32 %v271, 7
        %v273 = vsub.s32 %v270, %v272
        %v274 = vrot.slane %v266, %v273
        %v276 = vunpack.c.l.s4 1934713408
        %v277 = vunpack.c.0.s8 %v276
        %v278 = vlaneseq
        %v279 = vshrl.u32 %v278, 7
        %v280 = vsub.s32 %v277, %v279
        %v281 = vrot.slane %v267, %v280
        %v282 = vcombine.high %v258, 0.0
        %v283 = vcombine.high %v265, 0.0
        %v284 = vcombine.high %v274, 0.0
        %v285 = vcombine.high %v281, 0.0
        %287 = vrot.lane.b32.xlu0 %v214, 16
        %v288 = vpop.permute.xlu0 %287
        %291 = vrot.lane.b32.xlu0 %v197, 32
        %v292 = vpop.permute.xlu0 %291
        %295 = vrot.lane.b32.xlu0 %v215, 48
        %v296 = vpop.permute.xlu0 %295
        %299 = vrot.lane.b32.xlu0 %v206, 64
        %v300 = vpop.permute.xlu0 %299
        %303 = vrot.lane.b32.xlu0 %v216, 80
        %v304 = vpop.permute.xlu0 %303
        %307 = vrot.lane.b32.xlu0 %v213, 96
        %v308 = vpop.permute.xlu0 %307
        %311 = vrot.lane.b32.xlu0 %v217, 112
        %v312 = vpop.permute.xlu0 %311
        %315 = vrot.lane.b32.xlu0 %v282, 16
        %v316 = vpop.permute.xlu0 %315
        %319 = vrot.lane.b32.xlu0 %v265, 32
        %v320 = vpop.permute.xlu0 %319
        %323 = vrot.lane.b32.xlu0 %v283, 48
        %v324 = vpop.permute.xlu0 %323
        %327 = vrot.lane.b32.xlu0 %v274, 64
        %v328 = vpop.permute.xlu0 %327
        %331 = vrot.lane.b32.xlu0 %v284, 80
        %v332 = vpop.permute.xlu0 %331
        %335 = vrot.lane.b32.xlu0 %v281, 96
        %v336 = vpop.permute.xlu0 %335
        %339 = vrot.lane.b32.xlu0 %v285, 112
        %v340 = vpop.permute.xlu0 %339
        %vm342 = vcmask 130048
        %v343 = vsel %vm342, %v190, %v288
        %vm344 = vcmask 261120
        %v345 = vsel %vm344, %v343, %v292
        %vm346 = vcmask 392192
        %v347 = vsel %vm346, %v345, %v296
        %vm348 = vcmask 523264
        %v349 = vsel %vm348, %v347, %v300
        %vm350 = vcmask 654336
        %v351 = vsel %vm350, %v349, %v304
        %vm352 = vcmask 785408
        %v353 = vsel %vm352, %v351, %v308
        %vm354 = vcmask 916480
        %v355 = vsel %vm354, %v353, %v312
        %v356 = vsel %vm342, %v258, %v316
        %v357 = vsel %vm344, %v356, %v320
        %v358 = vsel %vm346, %v357, %v324
        %v359 = vsel %vm348, %v358, %v328
        %v360 = vsel %vm350, %v359, %v332
        %v361 = vsel %vm352, %v360, %v336
        %v362 = vsel %vm354, %v361, %v340
        %363 = vst [vmem:[#allocation2] sm:$0xf] %v355
        %364 = vst [vmem:[#allocation2 + $0x8] sm:$0xf] %v362
        %v365 = vld [vmem:[%s141] sm:$0xff]
        %v366 = vld [vmem:[%s141 + $0x8] sm:$0xff]
        %v367 = vld [vmem:[%s141 + $0x18] sm:$0xff]
        %v368 = vld [vmem:[%s141 + $0x20] sm:$0xff]
        %v369 = vld [vmem:[%s141 + $0x30] sm:$0xff]
        %v370 = vld [vmem:[%s141 + $0x38] sm:$0xff]
        %v371 = vld [vmem:[%s141 + $0x48] sm:$0xff]
        %v372 = vld [vmem:[%s141 + $0x50] sm:$0xff]
        %381 = vrot.lane.b32.xlu0 %v365, 127
        %v382 = vpop.permute.xlu0 %381
        %383 = vrot.lane.b32.xlu0 %v366, 127
        %v384 = vpop.permute.xlu0 %383
        %385 = vrot.lane.b32.xlu0 %v367, 127
        %v386 = vpop.permute.xlu0 %385
        %387 = vrot.lane.b32.xlu0 %v368, 127
        %v388 = vpop.permute.xlu0 %387
        %389 = vrot.lane.b32.xlu0 %v369, 127
        %v390 = vpop.permute.xlu0 %389
        %391 = vrot.lane.b32.xlu0 %v370, 127
        %v392 = vpop.permute.xlu0 %391
        %393 = vrot.lane.b32.xlu0 %v371, 127
        %v394 = vpop.permute.xlu0 %393
        %395 = vrot.lane.b32.xlu0 %v372, 127
        %v396 = vpop.permute.xlu0 %395
        %v405 = vcombine.low %v382, %v390
        %v406 = vcombine.high %v382, %v390
        %v408 = vunpack.c.l.s4 1983009808
        %v409 = vunpack.c.0.s8 %v408
        %v410 = vlaneseq
        %v411 = vshrl.u32 %v410, 7
        %v412 = vsub.s32 %v409, %v411
        %v413 = vrot.slane %v405, %v412
        %v415 = vunpack.c.l.s4 1983009808
        %v416 = vunpack.c.0.s8 %v415
        %v417 = vlaneseq
        %v418 = vshrl.u32 %v417, 7
        %v419 = vsub.s32 %v416, %v418
        %v420 = vrot.slane %v406, %v419
        %v421 = vcombine.low %v386, %v394
        %v422 = vcombine.high %v386, %v394
        %v424 = vunpack.c.l.s4 1983009808
        %v425 = vunpack.c.0.s8 %v424
        %v426 = vlaneseq
        %v427 = vshrl.u32 %v426, 7
        %v428 = vsub.s32 %v425, %v427
        %v429 = vrot.slane %v421, %v428
        %v431 = vunpack.c.l.s4 1983009808
        %v432 = vunpack.c.0.s8 %v431
        %v433 = vlaneseq
        %v434 = vshrl.u32 %v433, 7
        %v435 = vsub.s32 %v432, %v434
        %v436 = vrot.slane %v422, %v435
        %v437 = vcombine.low %v413, %v429
        %v438 = vcombine.high %v413, %v429
        %v440 = vunpack.c.l.s4 1934713408
        %v441 = vunpack.c.0.s8 %v440
        %v442 = vlaneseq
        %v443 = vshrl.u32 %v442, 7
        %v444 = vsub.s32 %v441, %v443
        %v445 = vrot.slane %v437, %v444
        %v447 = vunpack.c.l.s4 1934713408
        %v448 = vunpack.c.0.s8 %v447
        %v449 = vlaneseq
        %v450 = vshrl.u32 %v449, 7
        %v451 = vsub.s32 %v448, %v450
        %v452 = vrot.slane %v438, %v451
        %v453 = vcombine.low %v420, %v436
        %v454 = vcombine.high %v420, %v436
        %v456 = vunpack.c.l.s4 1934713408
        %v457 = vunpack.c.0.s8 %v456
        %v458 = vlaneseq
        %v459 = vshrl.u32 %v458, 7
        %v460 = vsub.s32 %v457, %v459
        %v461 = vrot.slane %v453, %v460
        %v463 = vunpack.c.l.s4 1934713408
        %v464 = vunpack.c.0.s8 %v463
        %v465 = vlaneseq
        %v466 = vshrl.u32 %v465, 7
        %v467 = vsub.s32 %v464, %v466
        %v468 = vrot.slane %v454, %v467
        %v469 = vcombine.high %v445, 0.0
        %v470 = vcombine.high %v452, 0.0
        %v471 = vcombine.high %v461, 0.0
        %v472 = vcombine.high %v468, 0.0
        %v473 = vcombine.low %v384, %v392
        %v474 = vcombine.high %v384, %v392
        %v476 = vunpack.c.l.s4 1983009808
        %v477 = vunpack.c.0.s8 %v476
        %v478 = vlaneseq
        %v479 = vshrl.u32 %v478, 7
        %v480 = vsub.s32 %v477, %v479
        %v481 = vrot.slane %v473, %v480
        %v483 = vunpack.c.l.s4 1983009808
        %v484 = vunpack.c.0.s8 %v483
        %v485 = vlaneseq
        %v486 = vshrl.u32 %v485, 7
        %v487 = vsub.s32 %v484, %v486
        %v488 = vrot.slane %v474, %v487
        %v489 = vcombine.low %v388, %v396
        %v490 = vcombine.high %v388, %v396
        %v492 = vunpack.c.l.s4 1983009808
        %v493 = vunpack.c.0.s8 %v492
        %v494 = vlaneseq
        %v495 = vshrl.u32 %v494, 7
        %v496 = vsub.s32 %v493, %v495
        %v497 = vrot.slane %v489, %v496
        %v499 = vunpack.c.l.s4 1983009808
        %v500 = vunpack.c.0.s8 %v499
        %v501 = vlaneseq
        %v502 = vshrl.u32 %v501, 7
        %v503 = vsub.s32 %v500, %v502
        %v504 = vrot.slane %v490, %v503
        %v505 = vcombine.low %v481, %v497
        %v506 = vcombine.high %v481, %v497
        %v508 = vunpack.c.l.s4 1934713408
        %v509 = vunpack.c.0.s8 %v508
        %v510 = vlaneseq
        %v511 = vshrl.u32 %v510, 7
        %v512 = vsub.s32 %v509, %v511
        %v513 = vrot.slane %v505, %v512
        %v515 = vunpack.c.l.s4 1934713408
        %v516 = vunpack.c.0.s8 %v515
        %v517 = vlaneseq
        %v518 = vshrl.u32 %v517, 7
        %v519 = vsub.s32 %v516, %v518
        %v520 = vrot.slane %v506, %v519
        %v521 = vcombine.low %v488, %v504
        %v522 = vcombine.high %v488, %v504
        %v524 = vunpack.c.l.s4 1934713408
        %v525 = vunpack.c.0.s8 %v524
        %v526 = vlaneseq
        %v527 = vshrl.u32 %v526, 7
        %v528 = vsub.s32 %v525, %v527
        %v529 = vrot.slane %v521, %v528
        %v531 = vunpack.c.l.s4 1934713408
        %v532 = vunpack.c.0.s8 %v531
        %v533 = vlaneseq
        %v534 = vshrl.u32 %v533, 7
        %v535 = vsub.s32 %v532, %v534
        %v536 = vrot.slane %v522, %v535
        %v537 = vcombine.high %v513, 0.0
        %v538 = vcombine.high %v520, 0.0
        %v539 = vcombine.high %v529, 0.0
        %v540 = vcombine.high %v536, 0.0
        %542 = vrot.lane.b32.xlu0 %v469, 16
        %v543 = vpop.permute.xlu0 %542
        %546 = vrot.lane.b32.xlu0 %v452, 32
        %v547 = vpop.permute.xlu0 %546
        %550 = vrot.lane.b32.xlu0 %v470, 48
        %v551 = vpop.permute.xlu0 %550
        %554 = vrot.lane.b32.xlu0 %v461, 64
        %v555 = vpop.permute.xlu0 %554
        %558 = vrot.lane.b32.xlu0 %v471, 80
        %v559 = vpop.permute.xlu0 %558
        %562 = vrot.lane.b32.xlu0 %v468, 96
        %v563 = vpop.permute.xlu0 %562
        %566 = vrot.lane.b32.xlu0 %v472, 112
        %v567 = vpop.permute.xlu0 %566
        %570 = vrot.lane.b32.xlu0 %v537, 16
        %v571 = vpop.permute.xlu0 %570
        %574 = vrot.lane.b32.xlu0 %v520, 32
        %v575 = vpop.permute.xlu0 %574
        %578 = vrot.lane.b32.xlu0 %v538, 48
        %v579 = vpop.permute.xlu0 %578
        %582 = vrot.lane.b32.xlu0 %v529, 64
        %v583 = vpop.permute.xlu0 %582
        %586 = vrot.lane.b32.xlu0 %v539, 80
        %v587 = vpop.permute.xlu0 %586
        %590 = vrot.lane.b32.xlu0 %v536, 96
        %v591 = vpop.permute.xlu0 %590
        %594 = vrot.lane.b32.xlu0 %v540, 112
        %v595 = vpop.permute.xlu0 %594
        %v597 = vsel %vm342, %v445, %v543
        %v598 = vsel %vm344, %v597, %v547
        %v599 = vsel %vm346, %v598, %v551
        %v600 = vsel %vm348, %v599, %v555
        %v601 = vsel %vm350, %v600, %v559
        %v602 = vsel %vm352, %v601, %v563
        %v603 = vsel %vm354, %v602, %v567
        %v604 = vsel %vm342, %v513, %v571
        %v605 = vsel %vm344, %v604, %v575
        %v606 = vsel %vm346, %v605, %v579
        %v607 = vsel %vm348, %v606, %v583
        %v608 = vsel %vm350, %v607, %v587
        %v609 = vsel %vm352, %v608, %v591
        %v610 = vsel %vm354, %v609, %v595
        %v613 = vrot.slane %v603, 4
        %v614 = vrot.slane %v610, 4
        %617 = vst [vmem:[#allocation2] sm:$0xf0] %v613
        %618 = vst [vmem:[#allocation2 + $0x8] sm:$0xf0] %v614
        %v619 = vld [vmem:[%s141] sm:$0xff]
        %v620 = vld [vmem:[%s141 + $0x8] sm:$0xff]
        %v621 = vld [vmem:[%s141 + $0x18] sm:$0xff]
        %v622 = vld [vmem:[%s141 + $0x20] sm:$0xff]
        %v623 = vld [vmem:[%s141 + $0x30] sm:$0xff]
        %v624 = vld [vmem:[%s141 + $0x38] sm:$0xff]
        %v625 = vld [vmem:[%s141 + $0x48] sm:$0xff]
        %v626 = vld [vmem:[%s141 + $0x50] sm:$0xff]
        %635 = vrot.lane.b32.xlu0 %v619, 126
        %v636 = vpop.permute.xlu0 %635
        %637 = vrot.lane.b32.xlu0 %v620, 126
        %v638 = vpop.permute.xlu0 %637
        %639 = vrot.lane.b32.xlu0 %v621, 126
        %v640 = vpop.permute.xlu0 %639
        %641 = vrot.lane.b32.xlu0 %v622, 126
        %v642 = vpop.permute.xlu0 %641
        %643 = vrot.lane.b32.xlu0 %v623, 126
        %v644 = vpop.permute.xlu0 %643
        %645 = vrot.lane.b32.xlu0 %v624, 126
        %v646 = vpop.permute.xlu0 %645
        %647 = vrot.lane.b32.xlu0 %v625, 126
        %v648 = vpop.permute.xlu0 %647
        %649 = vrot.lane.b32.xlu0 %v626, 126
        %v650 = vpop.permute.xlu0 %649
        %v659 = vcombine.low %v636, %v644
        %v660 = vcombine.high %v636, %v644
        %v662 = vunpack.c.l.s4 1983009808
        %v663 = vunpack.c.0.s8 %v662
        %v664 = vlaneseq
        %v665 = vshrl.u32 %v664, 7
        %v666 = vsub.s32 %v663, %v665
        %v667 = vrot.slane %v659, %v666
        %v669 = vunpack.c.l.s4 1983009808
        %v670 = vunpack.c.0.s8 %v669
        %v671 = vlaneseq
        %v672 = vshrl.u32 %v671, 7
        %v673 = vsub.s32 %v670, %v672
        %v674 = vrot.slane %v660, %v673
        %v675 = vcombine.low %v640, %v648
        %v676 = vcombine.high %v640, %v648
        %v678 = vunpack.c.l.s4 1983009808
        %v679 = vunpack.c.0.s8 %v678
        %v680 = vlaneseq
        %v681 = vshrl.u32 %v680, 7
        %v682 = vsub.s32 %v679, %v681
        %v683 = vrot.slane %v675, %v682
        %v685 = vunpack.c.l.s4 1983009808
        %v686 = vunpack.c.0.s8 %v685
        %v687 = vlaneseq
        %v688 = vshrl.u32 %v687, 7
        %v689 = vsub.s32 %v686, %v688
        %v690 = vrot.slane %v676, %v689
        %v691 = vcombine.low %v667, %v683
        %v692 = vcombine.high %v667, %v683
        %v694 = vunpack.c.l.s4 1934713408
        %v695 = vunpack.c.0.s8 %v694
        %v696 = vlaneseq
        %v697 = vshrl.u32 %v696, 7
        %v698 = vsub.s32 %v695, %v697
        %v699 = vrot.slane %v691, %v698
        %v701 = vunpack.c.l.s4 1934713408
        %v702 = vunpack.c.0.s8 %v701
        %v703 = vlaneseq
        %v704 = vshrl.u32 %v703, 7
        %v705 = vsub.s32 %v702, %v704
        %v706 = vrot.slane %v692, %v705
        %v707 = vcombine.low %v674, %v690
        %v708 = vcombine.high %v674, %v690
        %v710 = vunpack.c.l.s4 1934713408
        %v711 = vunpack.c.0.s8 %v710
        %v712 = vlaneseq
        %v713 = vshrl.u32 %v712, 7
        %v714 = vsub.s32 %v711, %v713
        %v715 = vrot.slane %v707, %v714
        %v717 = vunpack.c.l.s4 1934713408
        %v718 = vunpack.c.0.s8 %v717
        %v719 = vlaneseq
        %v720 = vshrl.u32 %v719, 7
        %v721 = vsub.s32 %v718, %v720
        %v722 = vrot.slane %v708, %v721
        %v723 = vcombine.high %v699, 0.0
        %v724 = vcombine.high %v706, 0.0
        %v725 = vcombine.high %v715, 0.0
        %v726 = vcombine.high %v722, 0.0
        %v727 = vcombine.low %v638, %v646
        %v728 = vcombine.high %v638, %v646
        %v730 = vunpack.c.l.s4 1983009808
        %v731 = vunpack.c.0.s8 %v730
        %v732 = vlaneseq
        %v733 = vshrl.u32 %v732, 7
        %v734 = vsub.s32 %v731, %v733
        %v735 = vrot.slane %v727, %v734
        %v737 = vunpack.c.l.s4 1983009808
        %v738 = vunpack.c.0.s8 %v737
        %v739 = vlaneseq
        %v740 = vshrl.u32 %v739, 7
        %v741 = vsub.s32 %v738, %v740
        %v742 = vrot.slane %v728, %v741
        %v743 = vcombine.low %v642, %v650
        %v744 = vcombine.high %v642, %v650
        %v746 = vunpack.c.l.s4 1983009808
        %v747 = vunpack.c.0.s8 %v746
        %v748 = vlaneseq
        %v749 = vshrl.u32 %v748, 7
        %v750 = vsub.s32 %v747, %v749
        %v751 = vrot.slane %v743, %v750
        %v753 = vunpack.c.l.s4 1983009808
        %v754 = vunpack.c.0.s8 %v753
        %v755 = vlaneseq
        %v756 = vshrl.u32 %v755, 7
        %v757 = vsub.s32 %v754, %v756
        %v758 = vrot.slane %v744, %v757
        %v759 = vcombine.low %v735, %v751
        %v760 = vcombine.high %v735, %v751
        %v762 = vunpack.c.l.s4 1934713408
        %v763 = vunpack.c.0.s8 %v762
        %v764 = vlaneseq
        %v765 = vshrl.u32 %v764, 7
        %v766 = vsub.s32 %v763, %v765
        %v767 = vrot.slane %v759, %v766
        %v769 = vunpack.c.l.s4 1934713408
        %v770 = vunpack.c.0.s8 %v769
        %v771 = vlaneseq
        %v772 = vshrl.u32 %v771, 7
        %v773 = vsub.s32 %v770, %v772
        %v774 = vrot.slane %v760, %v773
        %v775 = vcombine.low %v742, %v758
        %v776 = vcombine.high %v742, %v758
        %v778 = vunpack.c.l.s4 1934713408
        %v779 = vunpack.c.0.s8 %v778
        %v780 = vlaneseq
        %v781 = vshrl.u32 %v780, 7
        %v782 = vsub.s32 %v779, %v781
        %v783 = vrot.slane %v775, %v782
        %v785 = vunpack.c.l.s4 1934713408
        %v786 = vunpack.c.0.s8 %v785
        %v787 = vlaneseq
        %v788 = vshrl.u32 %v787, 7
        %v789 = vsub.s32 %v786, %v788
        %v790 = vrot.slane %v776, %v789
        %v791 = vcombine.high %v767, 0.0
        %v792 = vcombine.high %v774, 0.0
        %v793 = vcombine.high %v783, 0.0
        %v794 = vcombine.high %v790, 0.0
        %796 = vrot.lane.b32.xlu0 %v723, 16
        %v797 = vpop.permute.xlu0 %796
        %800 = vrot.lane.b32.xlu0 %v706, 32
        %v801 = vpop.permute.xlu0 %800
        %804 = vrot.lane.b32.xlu0 %v724, 48
        %v805 = vpop.permute.xlu0 %804
        %808 = vrot.lane.b32.xlu0 %v715, 64
        %v809 = vpop.permute.xlu0 %808
        %812 = vrot.lane.b32.xlu0 %v725, 80
        %v813 = vpop.permute.xlu0 %812
        %816 = vrot.lane.b32.xlu0 %v722, 96
        %v817 = vpop.permute.xlu0 %816
        %820 = vrot.lane.b32.xlu0 %v726, 112
        %v821 = vpop.permute.xlu0 %820
        %824 = vrot.lane.b32.xlu0 %v791, 16
        %v825 = vpop.permute.xlu0 %824
        %828 = vrot.lane.b32.xlu0 %v774, 32
        %v829 = vpop.permute.xlu0 %828
        %832 = vrot.lane.b32.xlu0 %v792, 48
        %v833 = vpop.permute.xlu0 %832
        %836 = vrot.lane.b32.xlu0 %v783, 64
        %v837 = vpop.permute.xlu0 %836
        %840 = vrot.lane.b32.xlu0 %v793, 80
        %v841 = vpop.permute.xlu0 %840
        %844 = vrot.lane.b32.xlu0 %v790, 96
        %v845 = vpop.permute.xlu0 %844
        %848 = vrot.lane.b32.xlu0 %v794, 112
        %v849 = vpop.permute.xlu0 %848
        %v851 = vsel %vm342, %v699, %v797
        %v852 = vsel %vm344, %v851, %v801
        %v853 = vsel %vm346, %v852, %v805
        %v854 = vsel %vm348, %v853, %v809
        %v855 = vsel %vm350, %v854, %v813
        %v856 = vsel %vm352, %v855, %v817
        %v857 = vsel %vm354, %v856, %v821
        %v858 = vsel %vm342, %v767, %v825
        %v859 = vsel %vm344, %v858, %v829
        %v860 = vsel %vm346, %v859, %v833
        %v861 = vsel %vm348, %v860, %v837
        %v862 = vsel %vm350, %v861, %v841
        %v863 = vsel %vm352, %v862, %v845
        %v864 = vsel %vm354, %v863, %v849
        %865 = vst [vmem:[#allocation2 + $0x10] sm:$0xf] %v857
        %866 = vst [vmem:[#allocation2 + $0x18] sm:$0xf] %v864
        %v867 = vld [vmem:[%s141 + $0x1] sm:$0xff]
        %v868 = vld [vmem:[%s141 + $0x9] sm:$0xff]
        %v869 = vld [vmem:[%s141 + $0x19] sm:$0xff]
        %v870 = vld [vmem:[%s141 + $0x21] sm:$0xff]
        %v871 = vld [vmem:[%s141 + $0x31] sm:$0xff]
        %v872 = vld [vmem:[%s141 + $0x39] sm:$0xff]
        %v873 = vld [vmem:[%s141 + $0x49] sm:$0xff]
        %v874 = vld [vmem:[%s141 + $0x51] sm:$0xff]
        %v875 = vcombine.low %v867, %v871
        %v876 = vcombine.high %v867, %v871
        %v878 = vunpack.c.l.s4 1983009808
        %v879 = vunpack.c.0.s8 %v878
        %v880 = vlaneseq
        %v881 = vshrl.u32 %v880, 7
        %v882 = vsub.s32 %v879, %v881
        %v883 = vrot.slane %v875, %v882
        %v885 = vunpack.c.l.s4 1983009808
        %v886 = vunpack.c.0.s8 %v885
        %v887 = vlaneseq
        %v888 = vshrl.u32 %v887, 7
        %v889 = vsub.s32 %v886, %v888
        %v890 = vrot.slane %v876, %v889
        %v891 = vcombine.low %v869, %v873
        %v892 = vcombine.high %v869, %v873
        %v894 = vunpack.c.l.s4 1983009808
        %v895 = vunpack.c.0.s8 %v894
        %v896 = vlaneseq
        %v897 = vshrl.u32 %v896, 7
        %v898 = vsub.s32 %v895, %v897
        %v899 = vrot.slane %v891, %v898
        %v901 = vunpack.c.l.s4 1983009808
        %v902 = vunpack.c.0.s8 %v901
        %v903 = vlaneseq
        %v904 = vshrl.u32 %v903, 7
        %v905 = vsub.s32 %v902, %v904
        %v906 = vrot.slane %v892, %v905
        %v907 = vcombine.low %v883, %v899
        %v908 = vcombine.high %v883, %v899
        %v910 = vunpack.c.l.s4 1934713408
        %v911 = vunpack.c.0.s8 %v910
        %v912 = vlaneseq
        %v913 = vshrl.u32 %v912, 7
        %v914 = vsub.s32 %v911, %v913
        %v915 = vrot.slane %v907, %v914
        %v917 = vunpack.c.l.s4 1934713408
        %v918 = vunpack.c.0.s8 %v917
        %v919 = vlaneseq
        %v920 = vshrl.u32 %v919, 7
        %v921 = vsub.s32 %v918, %v920
        %v922 = vrot.slane %v908, %v921
        %v923 = vcombine.low %v890, %v906
        %v924 = vcombine.high %v890, %v906
        %v926 = vunpack.c.l.s4 1934713408
        %v927 = vunpack.c.0.s8 %v926
        %v928 = vlaneseq
        %v929 = vshrl.u32 %v928, 7
        %v930 = vsub.s32 %v927, %v929
        %v931 = vrot.slane %v923, %v930
        %v933 = vunpack.c.l.s4 1934713408
        %v934 = vunpack.c.0.s8 %v933
        %v935 = vlaneseq
        %v936 = vshrl.u32 %v935, 7
        %v937 = vsub.s32 %v934, %v936
        %v938 = vrot.slane %v924, %v937
        %v939 = vcombine.high %v915, 0.0
        %v940 = vcombine.high %v922, 0.0
        %v941 = vcombine.high %v931, 0.0
        %v942 = vcombine.high %v938, 0.0
        %v943 = vcombine.low %v868, %v872
        %v944 = vcombine.high %v868, %v872
        %v946 = vunpack.c.l.s4 1983009808
        %v947 = vunpack.c.0.s8 %v946
        %v948 = vlaneseq
        %v949 = vshrl.u32 %v948, 7
        %v950 = vsub.s32 %v947, %v949
        %v951 = vrot.slane %v943, %v950
        %v953 = vunpack.c.l.s4 1983009808
        %v954 = vunpack.c.0.s8 %v953
        %v955 = vlaneseq
        %v956 = vshrl.u32 %v955, 7
        %v957 = vsub.s32 %v954, %v956
        %v958 = vrot.slane %v944, %v957
        %v959 = vcombine.low %v870, %v874
        %v960 = vcombine.high %v870, %v874
        %v962 = vunpack.c.l.s4 1983009808
        %v963 = vunpack.c.0.s8 %v962
        %v964 = vlaneseq
        %v965 = vshrl.u32 %v964, 7
        %v966 = vsub.s32 %v963, %v965
        %v967 = vrot.slane %v959, %v966
        %v969 = vunpack.c.l.s4 1983009808
        %v970 = vunpack.c.0.s8 %v969
        %v971 = vlaneseq
        %v972 = vshrl.u32 %v971, 7
        %v973 = vsub.s32 %v970, %v972
        %v974 = vrot.slane %v960, %v973
        %v975 = vcombine.low %v951, %v967
        %v976 = vcombine.high %v951, %v967
        %v978 = vunpack.c.l.s4 1934713408
        %v979 = vunpack.c.0.s8 %v978
        %v980 = vlaneseq
        %v981 = vshrl.u32 %v980, 7
        %v982 = vsub.s32 %v979, %v981
        %v983 = vrot.slane %v975, %v982
        %v985 = vunpack.c.l.s4 1934713408
        %v986 = vunpack.c.0.s8 %v985
        %v987 = vlaneseq
        %v988 = vshrl.u32 %v987, 7
        %v989 = vsub.s32 %v986, %v988
        %v990 = vrot.slane %v976, %v989
        %v991 = vcombine.low %v958, %v974
        %v992 = vcombine.high %v958, %v974
        %v994 = vunpack.c.l.s4 1934713408
        %v995 = vunpack.c.0.s8 %v994
        %v996 = vlaneseq
        %v997 = vshrl.u32 %v996, 7
        %v998 = vsub.s32 %v995, %v997
        %v999 = vrot.slane %v991, %v998
        %v1001 = vunpack.c.l.s4 1934713408
        %v1002 = vunpack.c.0.s8 %v1001
        %v1003 = vlaneseq
        %v1004 = vshrl.u32 %v1003, 7
        %v1005 = vsub.s32 %v1002, %v1004
        %v1006 = vrot.slane %v992, %v1005
        %v1007 = vcombine.high %v983, 0.0
        %v1008 = vcombine.high %v990, 0.0
        %v1009 = vcombine.high %v999, 0.0
        %v1010 = vcombine.high %v1006, 0.0
        %1012 = vrot.lane.b32.xlu0 %v939, 16
        %v1013 = vpop.permute.xlu0 %1012
        %1016 = vrot.lane.b32.xlu0 %v922, 32
        %v1017 = vpop.permute.xlu0 %1016
        %1020 = vrot.lane.b32.xlu0 %v940, 48
        %v1021 = vpop.permute.xlu0 %1020
        %1024 = vrot.lane.b32.xlu0 %v931, 64
        %v1025 = vpop.permute.xlu0 %1024
        %1028 = vrot.lane.b32.xlu0 %v941, 80
        %v1029 = vpop.permute.xlu0 %1028
        %1032 = vrot.lane.b32.xlu0 %v938, 96
        %v1033 = vpop.permute.xlu0 %1032
        %1036 = vrot.lane.b32.xlu0 %v942, 112
        %v1037 = vpop.permute.xlu0 %1036
        %1040 = vrot.lane.b32.xlu0 %v1007, 16
        %v1041 = vpop.permute.xlu0 %1040
        %1044 = vrot.lane.b32.xlu0 %v990, 32
        %v1045 = vpop.permute.xlu0 %1044
        %1048 = vrot.lane.b32.xlu0 %v1008, 48
        %v1049 = vpop.permute.xlu0 %1048
        %1052 = vrot.lane.b32.xlu0 %v999, 64
        %v1053 = vpop.permute.xlu0 %1052
        %1056 = vrot.lane.b32.xlu0 %v1009, 80
        %v1057 = vpop.permute.xlu0 %1056
        %1060 = vrot.lane.b32.xlu0 %v1006, 96
        %v1061 = vpop.permute.xlu0 %1060
        %1064 = vrot.lane.b32.xlu0 %v1010, 112
        %v1065 = vpop.permute.xlu0 %1064
        %v1067 = vsel %vm342, %v915, %v1013
        %v1068 = vsel %vm344, %v1067, %v1017
        %v1069 = vsel %vm346, %v1068, %v1021
        %v1070 = vsel %vm348, %v1069, %v1025
        %v1071 = vsel %vm350, %v1070, %v1029
        %v1072 = vsel %vm352, %v1071, %v1033
        %v1073 = vsel %vm354, %v1072, %v1037
        %v1074 = vsel %vm342, %v983, %v1041
        %v1075 = vsel %vm344, %v1074, %v1045
        %v1076 = vsel %vm346, %v1075, %v1049
        %v1077 = vsel %vm348, %v1076, %v1053
        %v1078 = vsel %vm350, %v1077, %v1057
        %v1079 = vsel %vm352, %v1078, %v1061
        %v1080 = vsel %vm354, %v1079, %v1065
        %v1083 = vrot.slane %v1073, 4
        %v1084 = vrot.slane %v1080, 4
        %1087 = vst [vmem:[#allocation2 + $0x10] sm:$0xf0] %v1083
        %1088 = vst [vmem:[#allocation2 + $0x18] sm:$0xf0] %v1084
        %v1089 = vld [vmem:[%s141 + $0x1] sm:$0xff]
        %v1090 = vld [vmem:[%s141 + $0x9] sm:$0xff]
        %v1091 = vld [vmem:[%s141 + $0x19] sm:$0xff]
        %v1092 = vld [vmem:[%s141 + $0x21] sm:$0xff]
        %v1093 = vld [vmem:[%s141 + $0x31] sm:$0xff]
        %v1094 = vld [vmem:[%s141 + $0x39] sm:$0xff]
        %v1095 = vld [vmem:[%s141 + $0x49] sm:$0xff]
        %v1096 = vld [vmem:[%s141 + $0x51] sm:$0xff]
        %1105 = vrot.lane.b32.xlu0 %v1089, 127
        %v1106 = vpop.permute.xlu0 %1105
        %1107 = vrot.lane.b32.xlu0 %v1090, 127
        %v1108 = vpop.permute.xlu0 %1107
        %1109 = vrot.lane.b32.xlu0 %v1091, 127
        %v1110 = vpop.permute.xlu0 %1109
        %1111 = vrot.lane.b32.xlu0 %v1092, 127
        %v1112 = vpop.permute.xlu0 %1111
        %1113 = vrot.lane.b32.xlu0 %v1093, 127
        %v1114 = vpop.permute.xlu0 %1113
        %1115 = vrot.lane.b32.xlu0 %v1094, 127
        %v1116 = vpop.permute.xlu0 %1115
        %1117 = vrot.lane.b32.xlu0 %v1095, 127
        %v1118 = vpop.permute.xlu0 %1117
        %1119 = vrot.lane.b32.xlu0 %v1096, 127
        %v1120 = vpop.permute.xlu0 %1119
        %v1129 = vcombine.low %v1106, %v1114
        %v1130 = vcombine.high %v1106, %v1114
        %v1132 = vunpack.c.l.s4 1983009808
        %v1133 = vunpack.c.0.s8 %v1132
        %v1134 = vlaneseq
        %v1135 = vshrl.u32 %v1134, 7
        %v1136 = vsub.s32 %v1133, %v1135
        %v1137 = vrot.slane %v1129, %v1136
        %v1139 = vunpack.c.l.s4 1983009808
        %v1140 = vunpack.c.0.s8 %v1139
        %v1141 = vlaneseq
        %v1142 = vshrl.u32 %v1141, 7
        %v1143 = vsub.s32 %v1140, %v1142
        %v1144 = vrot.slane %v1130, %v1143
        %v1145 = vcombine.low %v1110, %v1118
        %v1146 = vcombine.high %v1110, %v1118
        %v1148 = vunpack.c.l.s4 1983009808
        %v1149 = vunpack.c.0.s8 %v1148
        %v1150 = vlaneseq
        %v1151 = vshrl.u32 %v1150, 7
        %v1152 = vsub.s32 %v1149, %v1151
        %v1153 = vrot.slane %v1145, %v1152
        %v1155 = vunpack.c.l.s4 1983009808
        %v1156 = vunpack.c.0.s8 %v1155
        %v1157 = vlaneseq
        %v1158 = vshrl.u32 %v1157, 7
        %v1159 = vsub.s32 %v1156, %v1158
        %v1160 = vrot.slane %v1146, %v1159
        %v1161 = vcombine.low %v1137, %v1153
        %v1162 = vcombine.high %v1137, %v1153
        %v1164 = vunpack.c.l.s4 1934713408
        %v1165 = vunpack.c.0.s8 %v1164
        %v1166 = vlaneseq
        %v1167 = vshrl.u32 %v1166, 7
        %v1168 = vsub.s32 %v1165, %v1167
        %v1169 = vrot.slane %v1161, %v1168
        %v1171 = vunpack.c.l.s4 1934713408
        %v1172 = vunpack.c.0.s8 %v1171
        %v1173 = vlaneseq
        %v1174 = vshrl.u32 %v1173, 7
        %v1175 = vsub.s32 %v1172, %v1174
        %v1176 = vrot.slane %v1162, %v1175
        %v1177 = vcombine.low %v1144, %v1160
        %v1178 = vcombine.high %v1144, %v1160
        %v1180 = vunpack.c.l.s4 1934713408
        %v1181 = vunpack.c.0.s8 %v1180
        %v1182 = vlaneseq
        %v1183 = vshrl.u32 %v1182, 7
        %v1184 = vsub.s32 %v1181, %v1183
        %v1185 = vrot.slane %v1177, %v1184
        %v1187 = vunpack.c.l.s4 1934713408
        %v1188 = vunpack.c.0.s8 %v1187
        %v1189 = vlaneseq
        %v1190 = vshrl.u32 %v1189, 7
        %v1191 = vsub.s32 %v1188, %v1190
        %v1192 = vrot.slane %v1178, %v1191
        %v1193 = vcombine.high %v1169, 0.0
        %v1194 = vcombine.high %v1176, 0.0
        %v1195 = vcombine.high %v1185, 0.0
        %v1196 = vcombine.high %v1192, 0.0
        %v1197 = vcombine.low %v1108, %v1116
        %v1198 = vcombine.high %v1108, %v1116
        %v1200 = vunpack.c.l.s4 1983009808
        %v1201 = vunpack.c.0.s8 %v1200
        %v1202 = vlaneseq
        %v1203 = vshrl.u32 %v1202, 7
        %v1204 = vsub.s32 %v1201, %v1203
        %v1205 = vrot.slane %v1197, %v1204
        %v1207 = vunpack.c.l.s4 1983009808
        %v1208 = vunpack.c.0.s8 %v1207
        %v1209 = vlaneseq
        %v1210 = vshrl.u32 %v1209, 7
        %v1211 = vsub.s32 %v1208, %v1210
        %v1212 = vrot.slane %v1198, %v1211
        %v1213 = vcombine.low %v1112, %v1120
        %v1214 = vcombine.high %v1112, %v1120
        %v1216 = vunpack.c.l.s4 1983009808
        %v1217 = vunpack.c.0.s8 %v1216
        %v1218 = vlaneseq
        %v1219 = vshrl.u32 %v1218, 7
        %v1220 = vsub.s32 %v1217, %v1219
        %v1221 = vrot.slane %v1213, %v1220
        %v1223 = vunpack.c.l.s4 1983009808
        %v1224 = vunpack.c.0.s8 %v1223
        %v1225 = vlaneseq
        %v1226 = vshrl.u32 %v1225, 7
        %v1227 = vsub.s32 %v1224, %v1226
        %v1228 = vrot.slane %v1214, %v1227
        %v1229 = vcombine.low %v1205, %v1221
        %v1230 = vcombine.high %v1205, %v1221
        %v1232 = vunpack.c.l.s4 1934713408
        %v1233 = vunpack.c.0.s8 %v1232
        %v1234 = vlaneseq
        %v1235 = vshrl.u32 %v1234, 7
        %v1236 = vsub.s32 %v1233, %v1235
        %v1237 = vrot.slane %v1229, %v1236
        %v1239 = vunpack.c.l.s4 1934713408
        %v1240 = vunpack.c.0.s8 %v1239
        %v1241 = vlaneseq
        %v1242 = vshrl.u32 %v1241, 7
        %v1243 = vsub.s32 %v1240, %v1242
        %v1244 = vrot.slane %v1230, %v1243
        %v1245 = vcombine.low %v1212, %v1228
        %v1246 = vcombine.high %v1212, %v1228
        %v1248 = vunpack.c.l.s4 1934713408
        %v1249 = vunpack.c.0.s8 %v1248
        %v1250 = vlaneseq
        %v1251 = vshrl.u32 %v1250, 7
        %v1252 = vsub.s32 %v1249, %v1251
        %v1253 = vrot.slane %v1245, %v1252
        %v1255 = vunpack.c.l.s4 1934713408
        %v1256 = vunpack.c.0.s8 %v1255
        %v1257 = vlaneseq
        %v1258 = vshrl.u32 %v1257, 7
        %v1259 = vsub.s32 %v1256, %v1258
        %v1260 = vrot.slane %v1246, %v1259
        %v1261 = vcombine.high %v1237, 0.0
        %v1262 = vcombine.high %v1244, 0.0
        %v1263 = vcombine.high %v1253, 0.0
        %v1264 = vcombine.high %v1260, 0.0
        %1266 = vrot.lane.b32.xlu0 %v1193, 16
        %v1267 = vpop.permute.xlu0 %1266
        %1270 = vrot.lane.b32.xlu0 %v1176, 32
        %v1271 = vpop.permute.xlu0 %1270
        %1274 = vrot.lane.b32.xlu0 %v1194, 48
        %v1275 = vpop.permute.xlu0 %1274
        %1278 = vrot.lane.b32.xlu0 %v1185, 64
        %v1279 = vpop.permute.xlu0 %1278
        %1282 = vrot.lane.b32.xlu0 %v1195, 80
        %v1283 = vpop.permute.xlu0 %1282
        %1286 = vrot.lane.b32.xlu0 %v1192, 96
        %v1287 = vpop.permute.xlu0 %1286
        %1290 = vrot.lane.b32.xlu0 %v1196, 112
        %v1291 = vpop.permute.xlu0 %1290
        %1294 = vrot.lane.b32.xlu0 %v1261, 16
        %v1295 = vpop.permute.xlu0 %1294
        %1298 = vrot.lane.b32.xlu0 %v1244, 32
        %v1299 = vpop.permute.xlu0 %1298
        %1302 = vrot.lane.b32.xlu0 %v1262, 48
        %v1303 = vpop.permute.xlu0 %1302
        %1306 = vrot.lane.b32.xlu0 %v1253, 64
        %v1307 = vpop.permute.xlu0 %1306
        %1310 = vrot.lane.b32.xlu0 %v1263, 80
        %v1311 = vpop.permute.xlu0 %1310
        %1314 = vrot.lane.b32.xlu0 %v1260, 96
        %v1315 = vpop.permute.xlu0 %1314
        %1318 = vrot.lane.b32.xlu0 %v1264, 112
        %v1319 = vpop.permute.xlu0 %1318
        %v1321 = vsel %vm342, %v1169, %v1267
        %v1322 = vsel %vm344, %v1321, %v1271
        %v1323 = vsel %vm346, %v1322, %v1275
        %v1324 = vsel %vm348, %v1323, %v1279
        %v1325 = vsel %vm350, %v1324, %v1283
        %v1326 = vsel %vm352, %v1325, %v1287
        %v1327 = vsel %vm354, %v1326, %v1291
        %v1328 = vsel %vm342, %v1237, %v1295
        %v1329 = vsel %vm344, %v1328, %v1299
        %v1330 = vsel %vm346, %v1329, %v1303
        %v1331 = vsel %vm348, %v1330, %v1307
        %v1332 = vsel %vm350, %v1331, %v1311
        %v1333 = vsel %vm352, %v1332, %v1315
        %v1334 = vsel %vm354, %v1333, %v1319
        %1335 = vst [vmem:[#allocation2 + $0x20] sm:$0xf] %v1327
        %1336 = vst [vmem:[#allocation2 + $0x28] sm:$0xf] %v1334
        %v1337 = vld [vmem:[%s141 + $0x1] sm:$0xff]
        %v1338 = vld [vmem:[%s141 + $0x9] sm:$0xff]
        %v1339 = vld [vmem:[%s141 + $0x19] sm:$0xff]
        %v1340 = vld [vmem:[%s141 + $0x21] sm:$0xff]
        %v1341 = vld [vmem:[%s141 + $0x31] sm:$0xff]
        %v1342 = vld [vmem:[%s141 + $0x39] sm:$0xff]
        %v1343 = vld [vmem:[%s141 + $0x49] sm:$0xff]
        %v1344 = vld [vmem:[%s141 + $0x51] sm:$0xff]
        %1353 = vrot.lane.b32.xlu0 %v1337, 126
        %v1354 = vpop.permute.xlu0 %1353
        %1355 = vrot.lane.b32.xlu0 %v1338, 126
        %v1356 = vpop.permute.xlu0 %1355
        %1357 = vrot.lane.b32.xlu0 %v1339, 126
        %v1358 = vpop.permute.xlu0 %1357
        %1359 = vrot.lane.b32.xlu0 %v1340, 126
        %v1360 = vpop.permute.xlu0 %1359
        %1361 = vrot.lane.b32.xlu0 %v1341, 126
        %v1362 = vpop.permute.xlu0 %1361
        %1363 = vrot.lane.b32.xlu0 %v1342, 126
        %v1364 = vpop.permute.xlu0 %1363
        %1365 = vrot.lane.b32.xlu0 %v1343, 126
        %v1366 = vpop.permute.xlu0 %1365
        %1367 = vrot.lane.b32.xlu0 %v1344, 126
        %v1368 = vpop.permute.xlu0 %1367
        %v1377 = vcombine.low %v1354, %v1362
        %v1378 = vcombine.high %v1354, %v1362
        %v1380 = vunpack.c.l.s4 1983009808
        %v1381 = vunpack.c.0.s8 %v1380
        %v1382 = vlaneseq
        %v1383 = vshrl.u32 %v1382, 7
        %v1384 = vsub.s32 %v1381, %v1383
        %v1385 = vrot.slane %v1377, %v1384
        %v1387 = vunpack.c.l.s4 1983009808
        %v1388 = vunpack.c.0.s8 %v1387
        %v1389 = vlaneseq
        %v1390 = vshrl.u32 %v1389, 7
        %v1391 = vsub.s32 %v1388, %v1390
        %v1392 = vrot.slane %v1378, %v1391
        %v1393 = vcombine.low %v1358, %v1366
        %v1394 = vcombine.high %v1358, %v1366
        %v1396 = vunpack.c.l.s4 1983009808
        %v1397 = vunpack.c.0.s8 %v1396
        %v1398 = vlaneseq
        %v1399 = vshrl.u32 %v1398, 7
        %v1400 = vsub.s32 %v1397, %v1399
        %v1401 = vrot.slane %v1393, %v1400
        %v1403 = vunpack.c.l.s4 1983009808
        %v1404 = vunpack.c.0.s8 %v1403
        %v1405 = vlaneseq
        %v1406 = vshrl.u32 %v1405, 7
        %v1407 = vsub.s32 %v1404, %v1406
        %v1408 = vrot.slane %v1394, %v1407
        %v1409 = vcombine.low %v1385, %v1401
        %v1410 = vcombine.high %v1385, %v1401
        %v1412 = vunpack.c.l.s4 1934713408
        %v1413 = vunpack.c.0.s8 %v1412
        %v1414 = vlaneseq
        %v1415 = vshrl.u32 %v1414, 7
        %v1416 = vsub.s32 %v1413, %v1415
        %v1417 = vrot.slane %v1409, %v1416
        %v1419 = vunpack.c.l.s4 1934713408
        %v1420 = vunpack.c.0.s8 %v1419
        %v1421 = vlaneseq
        %v1422 = vshrl.u32 %v1421, 7
        %v1423 = vsub.s32 %v1420, %v1422
        %v1424 = vrot.slane %v1410, %v1423
        %v1425 = vcombine.low %v1392, %v1408
        %v1426 = vcombine.high %v1392, %v1408
        %v1428 = vunpack.c.l.s4 1934713408
        %v1429 = vunpack.c.0.s8 %v1428
        %v1430 = vlaneseq
        %v1431 = vshrl.u32 %v1430, 7
        %v1432 = vsub.s32 %v1429, %v1431
        %v1433 = vrot.slane %v1425, %v1432
        %v1435 = vunpack.c.l.s4 1934713408
        %v1436 = vunpack.c.0.s8 %v1435
        %v1437 = vlaneseq
        %v1438 = vshrl.u32 %v1437, 7
        %v1439 = vsub.s32 %v1436, %v1438
        %v1440 = vrot.slane %v1426, %v1439
        %v1441 = vcombine.high %v1417, 0.0
        %v1442 = vcombine.high %v1424, 0.0
        %v1443 = vcombine.high %v1433, 0.0
        %v1444 = vcombine.high %v1440, 0.0
        %v1445 = vcombine.low %v1356, %v1364
        %v1446 = vcombine.high %v1356, %v1364
        %v1448 = vunpack.c.l.s4 1983009808
        %v1449 = vunpack.c.0.s8 %v1448
        %v1450 = vlaneseq
        %v1451 = vshrl.u32 %v1450, 7
        %v1452 = vsub.s32 %v1449, %v1451
        %v1453 = vrot.slane %v1445, %v1452
        %v1455 = vunpack.c.l.s4 1983009808
        %v1456 = vunpack.c.0.s8 %v1455
        %v1457 = vlaneseq
        %v1458 = vshrl.u32 %v1457, 7
        %v1459 = vsub.s32 %v1456, %v1458
        %v1460 = vrot.slane %v1446, %v1459
        %v1461 = vcombine.low %v1360, %v1368
        %v1462 = vcombine.high %v1360, %v1368
        %v1464 = vunpack.c.l.s4 1983009808
        %v1465 = vunpack.c.0.s8 %v1464
        %v1466 = vlaneseq
        %v1467 = vshrl.u32 %v1466, 7
        %v1468 = vsub.s32 %v1465, %v1467
        %v1469 = vrot.slane %v1461, %v1468
        %v1471 = vunpack.c.l.s4 1983009808
        %v1472 = vunpack.c.0.s8 %v1471
        %v1473 = vlaneseq
        %v1474 = vshrl.u32 %v1473, 7
        %v1475 = vsub.s32 %v1472, %v1474
        %v1476 = vrot.slane %v1462, %v1475
        %v1477 = vcombine.low %v1453, %v1469
        %v1478 = vcombine.high %v1453, %v1469
        %v1480 = vunpack.c.l.s4 1934713408
        %v1481 = vunpack.c.0.s8 %v1480
        %v1482 = vlaneseq
        %v1483 = vshrl.u32 %v1482, 7
        %v1484 = vsub.s32 %v1481, %v1483
        %v1485 = vrot.slane %v1477, %v1484
        %v1487 = vunpack.c.l.s4 1934713408
        %v1488 = vunpack.c.0.s8 %v1487
        %v1489 = vlaneseq
        %v1490 = vshrl.u32 %v1489, 7
        %v1491 = vsub.s32 %v1488, %v1490
        %v1492 = vrot.slane %v1478, %v1491
        %v1493 = vcombine.low %v1460, %v1476
        %v1494 = vcombine.high %v1460, %v1476
        %v1496 = vunpack.c.l.s4 1934713408
        %v1497 = vunpack.c.0.s8 %v1496
        %v1498 = vlaneseq
        %v1499 = vshrl.u32 %v1498, 7
        %v1500 = vsub.s32 %v1497, %v1499
        %v1501 = vrot.slane %v1493, %v1500
        %v1503 = vunpack.c.l.s4 1934713408
        %v1504 = vunpack.c.0.s8 %v1503
        %v1505 = vlaneseq
        %v1506 = vshrl.u32 %v1505, 7
        %v1507 = vsub.s32 %v1504, %v1506
        %v1508 = vrot.slane %v1494, %v1507
        %v1509 = vcombine.high %v1485, 0.0
        %v1510 = vcombine.high %v1492, 0.0
        %v1511 = vcombine.high %v1501, 0.0
        %v1512 = vcombine.high %v1508, 0.0
        %1514 = vrot.lane.b32.xlu0 %v1441, 16
        %v1515 = vpop.permute.xlu0 %1514
        %1518 = vrot.lane.b32.xlu0 %v1424, 32
        %v1519 = vpop.permute.xlu0 %1518
        %1522 = vrot.lane.b32.xlu0 %v1442, 48
        %v1523 = vpop.permute.xlu0 %1522
        %1526 = vrot.lane.b32.xlu0 %v1433, 64
        %v1527 = vpop.permute.xlu0 %1526
        %1530 = vrot.lane.b32.xlu0 %v1443, 80
        %v1531 = vpop.permute.xlu0 %1530
        %1534 = vrot.lane.b32.xlu0 %v1440, 96
        %v1535 = vpop.permute.xlu0 %1534
        %1538 = vrot.lane.b32.xlu0 %v1444, 112
        %v1539 = vpop.permute.xlu0 %1538
        %1542 = vrot.lane.b32.xlu0 %v1509, 16
        %v1543 = vpop.permute.xlu0 %1542
        %1546 = vrot.lane.b32.xlu0 %v1492, 32
        %v1547 = vpop.permute.xlu0 %1546
        %1550 = vrot.lane.b32.xlu0 %v1510, 48
        %v1551 = vpop.permute.xlu0 %1550
        %1554 = vrot.lane.b32.xlu0 %v1501, 64
        %v1555 = vpop.permute.xlu0 %1554
        %1558 = vrot.lane.b32.xlu0 %v1511, 80
        %v1559 = vpop.permute.xlu0 %1558
        %1562 = vrot.lane.b32.xlu0 %v1508, 96
        %v1563 = vpop.permute.xlu0 %1562
        %1566 = vrot.lane.b32.xlu0 %v1512, 112
        %v1567 = vpop.permute.xlu0 %1566
        %v1569 = vsel %vm342, %v1417, %v1515
        %v1570 = vsel %vm344, %v1569, %v1519
        %v1571 = vsel %vm346, %v1570, %v1523
        %v1572 = vsel %vm348, %v1571, %v1527
        %v1573 = vsel %vm350, %v1572, %v1531
        %v1574 = vsel %vm352, %v1573, %v1535
        %v1575 = vsel %vm354, %v1574, %v1539
        %v1576 = vsel %vm342, %v1485, %v1543
        %v1577 = vsel %vm344, %v1576, %v1547
        %v1578 = vsel %vm346, %v1577, %v1551
        %v1579 = vsel %vm348, %v1578, %v1555
        %v1580 = vsel %vm350, %v1579, %v1559
        %v1581 = vsel %vm352, %v1580, %v1563
        %v1582 = vsel %vm354, %v1581, %v1567
        %v1585 = vrot.slane %v1575, 4
        %v1586 = vrot.slane %v1582, 4
        %1589 = vst [vmem:[#allocation2 + $0x20] sm:$0xf0] %v1585
        %1590 = vst [vmem:[#allocation2 + $0x28] sm:$0xf0] %v1586
        %v1591 = vld [vmem:[%s141 + $0x2] sm:$0xff]
        %v1592 = vld [vmem:[%s141 + $0xa] sm:$0xff]
        %v1593 = vld [vmem:[%s141 + $0x1a] sm:$0xff]
        %v1594 = vld [vmem:[%s141 + $0x22] sm:$0xff]
        %v1595 = vld [vmem:[%s141 + $0x32] sm:$0xff]
        %v1596 = vld [vmem:[%s141 + $0x3a] sm:$0xff]
        %v1597 = vld [vmem:[%s141 + $0x4a] sm:$0xff]
        %v1598 = vld [vmem:[%s141 + $0x52] sm:$0xff]
        %v1599 = vcombine.low %v1591, %v1595
        %v1600 = vcombine.high %v1591, %v1595
        %v1602 = vunpack.c.l.s4 1983009808
        %v1603 = vunpack.c.0.s8 %v1602
        %v1604 = vlaneseq
        %v1605 = vshrl.u32 %v1604, 7
        %v1606 = vsub.s32 %v1603, %v1605
        %v1607 = vrot.slane %v1599, %v1606
        %v1609 = vunpack.c.l.s4 1983009808
        %v1610 = vunpack.c.0.s8 %v1609
        %v1611 = vlaneseq
        %v1612 = vshrl.u32 %v1611, 7
        %v1613 = vsub.s32 %v1610, %v1612
        %v1614 = vrot.slane %v1600, %v1613
        %v1615 = vcombine.low %v1593, %v1597
        %v1616 = vcombine.high %v1593, %v1597
        %v1618 = vunpack.c.l.s4 1983009808
        %v1619 = vunpack.c.0.s8 %v1618
        %v1620 = vlaneseq
        %v1621 = vshrl.u32 %v1620, 7
        %v1622 = vsub.s32 %v1619, %v1621
        %v1623 = vrot.slane %v1615, %v1622
        %v1625 = vunpack.c.l.s4 1983009808
        %v1626 = vunpack.c.0.s8 %v1625
        %v1627 = vlaneseq
        %v1628 = vshrl.u32 %v1627, 7
        %v1629 = vsub.s32 %v1626, %v1628
        %v1630 = vrot.slane %v1616, %v1629
        %v1631 = vcombine.low %v1607, %v1623
        %v1632 = vcombine.high %v1607, %v1623
        %v1634 = vunpack.c.l.s4 1934713408
        %v1635 = vunpack.c.0.s8 %v1634
        %v1636 = vlaneseq
        %v1637 = vshrl.u32 %v1636, 7
        %v1638 = vsub.s32 %v1635, %v1637
        %v1639 = vrot.slane %v1631, %v1638
        %v1641 = vunpack.c.l.s4 1934713408
        %v1642 = vunpack.c.0.s8 %v1641
        %v1643 = vlaneseq
        %v1644 = vshrl.u32 %v1643, 7
        %v1645 = vsub.s32 %v1642, %v1644
        %v1646 = vrot.slane %v1632, %v1645
        %v1647 = vcombine.low %v1614, %v1630
        %v1648 = vcombine.high %v1614, %v1630
        %v1650 = vunpack.c.l.s4 1934713408
        %v1651 = vunpack.c.0.s8 %v1650
        %v1652 = vlaneseq
        %v1653 = vshrl.u32 %v1652, 7
        %v1654 = vsub.s32 %v1651, %v1653
        %v1655 = vrot.slane %v1647, %v1654
        %v1657 = vunpack.c.l.s4 1934713408
        %v1658 = vunpack.c.0.s8 %v1657
        %v1659 = vlaneseq
        %v1660 = vshrl.u32 %v1659, 7
        %v1661 = vsub.s32 %v1658, %v1660
        %v1662 = vrot.slane %v1648, %v1661
        %v1663 = vcombine.high %v1639, 0.0
        %v1664 = vcombine.high %v1646, 0.0
        %v1665 = vcombine.high %v1655, 0.0
        %v1666 = vcombine.high %v1662, 0.0
        %v1667 = vcombine.low %v1592, %v1596
        %v1668 = vcombine.high %v1592, %v1596
        %v1670 = vunpack.c.l.s4 1983009808
        %v1671 = vunpack.c.0.s8 %v1670
        %v1672 = vlaneseq
        %v1673 = vshrl.u32 %v1672, 7
        %v1674 = vsub.s32 %v1671, %v1673
        %v1675 = vrot.slane %v1667, %v1674
        %v1677 = vunpack.c.l.s4 1983009808
        %v1678 = vunpack.c.0.s8 %v1677
        %v1679 = vlaneseq
        %v1680 = vshrl.u32 %v1679, 7
        %v1681 = vsub.s32 %v1678, %v1680
        %v1682 = vrot.slane %v1668, %v1681
        %v1683 = vcombine.low %v1594, %v1598
        %v1684 = vcombine.high %v1594, %v1598
        %v1686 = vunpack.c.l.s4 1983009808
        %v1687 = vunpack.c.0.s8 %v1686
        %v1688 = vlaneseq
        %v1689 = vshrl.u32 %v1688, 7
        %v1690 = vsub.s32 %v1687, %v1689
        %v1691 = vrot.slane %v1683, %v1690
        %v1693 = vunpack.c.l.s4 1983009808
        %v1694 = vunpack.c.0.s8 %v1693
        %v1695 = vlaneseq
        %v1696 = vshrl.u32 %v1695, 7
        %v1697 = vsub.s32 %v1694, %v1696
        %v1698 = vrot.slane %v1684, %v1697
        %v1699 = vcombine.low %v1675, %v1691
        %v1700 = vcombine.high %v1675, %v1691
        %v1702 = vunpack.c.l.s4 1934713408
        %v1703 = vunpack.c.0.s8 %v1702
        %v1704 = vlaneseq
        %v1705 = vshrl.u32 %v1704, 7
        %v1706 = vsub.s32 %v1703, %v1705
        %v1707 = vrot.slane %v1699, %v1706
        %v1709 = vunpack.c.l.s4 1934713408
        %v1710 = vunpack.c.0.s8 %v1709
        %v1711 = vlaneseq
        %v1712 = vshrl.u32 %v1711, 7
        %v1713 = vsub.s32 %v1710, %v1712
        %v1714 = vrot.slane %v1700, %v1713
        %v1715 = vcombine.low %v1682, %v1698
        %v1716 = vcombine.high %v1682, %v1698
        %v1718 = vunpack.c.l.s4 1934713408
        %v1719 = vunpack.c.0.s8 %v1718
        %v1720 = vlaneseq
        %v1721 = vshrl.u32 %v1720, 7
        %v1722 = vsub.s32 %v1719, %v1721
        %v1723 = vrot.slane %v1715, %v1722
        %v1725 = vunpack.c.l.s4 1934713408
        %v1726 = vunpack.c.0.s8 %v1725
        %v1727 = vlaneseq
        %v1728 = vshrl.u32 %v1727, 7
        %v1729 = vsub.s32 %v1726, %v1728
        %v1730 = vrot.slane %v1716, %v1729
        %v1731 = vcombine.high %v1707, 0.0
        %v1732 = vcombine.high %v1714, 0.0
        %v1733 = vcombine.high %v1723, 0.0
        %v1734 = vcombine.high %v1730, 0.0
        %1736 = vrot.lane.b32.xlu0 %v1663, 16
        %v1737 = vpop.permute.xlu0 %1736
        %1740 = vrot.lane.b32.xlu0 %v1646, 32
        %v1741 = vpop.permute.xlu0 %1740
        %1744 = vrot.lane.b32.xlu0 %v1664, 48
        %v1745 = vpop.permute.xlu0 %1744
        %1748 = vrot.lane.b32.xlu0 %v1655, 64
        %v1749 = vpop.permute.xlu0 %1748
        %1752 = vrot.lane.b32.xlu0 %v1665, 80
        %v1753 = vpop.permute.xlu0 %1752
        %1756 = vrot.lane.b32.xlu0 %v1662, 96
        %v1757 = vpop.permute.xlu0 %1756
        %1760 = vrot.lane.b32.xlu0 %v1666, 112
        %v1761 = vpop.permute.xlu0 %1760
        %1764 = vrot.lane.b32.xlu0 %v1731, 16
        %v1765 = vpop.permute.xlu0 %1764
        %1768 = vrot.lane.b32.xlu0 %v1714, 32
        %v1769 = vpop.permute.xlu0 %1768
        %1772 = vrot.lane.b32.xlu0 %v1732, 48
        %v1773 = vpop.permute.xlu0 %1772
        %1776 = vrot.lane.b32.xlu0 %v1723, 64
        %v1777 = vpop.permute.xlu0 %1776
        %1780 = vrot.lane.b32.xlu0 %v1733, 80
        %v1781 = vpop.permute.xlu0 %1780
        %1784 = vrot.lane.b32.xlu0 %v1730, 96
        %v1785 = vpop.permute.xlu0 %1784
        %1788 = vrot.lane.b32.xlu0 %v1734, 112
        %v1789 = vpop.permute.xlu0 %1788
        %v1791 = vsel %vm342, %v1639, %v1737
        %v1792 = vsel %vm344, %v1791, %v1741
        %v1793 = vsel %vm346, %v1792, %v1745
        %v1794 = vsel %vm348, %v1793, %v1749
        %v1795 = vsel %vm350, %v1794, %v1753
        %v1796 = vsel %vm352, %v1795, %v1757
        %v1797 = vsel %vm354, %v1796, %v1761
        %v1798 = vsel %vm342, %v1707, %v1765
        %v1799 = vsel %vm344, %v1798, %v1769
        %v1800 = vsel %vm346, %v1799, %v1773
        %v1801 = vsel %vm348, %v1800, %v1777
        %v1802 = vsel %vm350, %v1801, %v1781
        %v1803 = vsel %vm352, %v1802, %v1785
        %v1804 = vsel %vm354, %v1803, %v1789
        %1805 = vst [vmem:[#allocation2 + $0x30] sm:$0xf] %v1797
        %1806 = vst [vmem:[#allocation2 + $0x38] sm:$0xf] %v1804
        %v1807 = vld [vmem:[%s141 + $0x2] sm:$0xff]
        %v1808 = vld [vmem:[%s141 + $0xa] sm:$0xff]
        %v1809 = vld [vmem:[%s141 + $0x1a] sm:$0xff]
        %v1810 = vld [vmem:[%s141 + $0x22] sm:$0xff]
        %v1811 = vld [vmem:[%s141 + $0x32] sm:$0xff]
        %v1812 = vld [vmem:[%s141 + $0x3a] sm:$0xff]
        %v1813 = vld [vmem:[%s141 + $0x4a] sm:$0xff]
        %v1814 = vld [vmem:[%s141 + $0x52] sm:$0xff]
        %1823 = vrot.lane.b32.xlu0 %v1807, 127
        %v1824 = vpop.permute.xlu0 %1823
        %1825 = vrot.lane.b32.xlu0 %v1808, 127
        %v1826 = vpop.permute.xlu0 %1825
        %1827 = vrot.lane.b32.xlu0 %v1809, 127
        %v1828 = vpop.permute.xlu0 %1827
        %1829 = vrot.lane.b32.xlu0 %v1810, 127
        %v1830 = vpop.permute.xlu0 %1829
        %1831 = vrot.lane.b32.xlu0 %v1811, 127
        %v1832 = vpop.permute.xlu0 %1831
        %1833 = vrot.lane.b32.xlu0 %v1812, 127
        %v1834 = vpop.permute.xlu0 %1833
        %1835 = vrot.lane.b32.xlu0 %v1813, 127
        %v1836 = vpop.permute.xlu0 %1835
        %1837 = vrot.lane.b32.xlu0 %v1814, 127
        %v1838 = vpop.permute.xlu0 %1837
        %v1847 = vcombine.low %v1824, %v1832
        %v1848 = vcombine.high %v1824, %v1832
        %v1850 = vunpack.c.l.s4 1983009808
        %v1851 = vunpack.c.0.s8 %v1850
        %v1852 = vlaneseq
        %v1853 = vshrl.u32 %v1852, 7
        %v1854 = vsub.s32 %v1851, %v1853
        %v1855 = vrot.slane %v1847, %v1854
        %v1857 = vunpack.c.l.s4 1983009808
        %v1858 = vunpack.c.0.s8 %v1857
        %v1859 = vlaneseq
        %v1860 = vshrl.u32 %v1859, 7
        %v1861 = vsub.s32 %v1858, %v1860
        %v1862 = vrot.slane %v1848, %v1861
        %v1863 = vcombine.low %v1828, %v1836
        %v1864 = vcombine.high %v1828, %v1836
        %v1866 = vunpack.c.l.s4 1983009808
        %v1867 = vunpack.c.0.s8 %v1866
        %v1868 = vlaneseq
        %v1869 = vshrl.u32 %v1868, 7
        %v1870 = vsub.s32 %v1867, %v1869
        %v1871 = vrot.slane %v1863, %v1870
        %v1873 = vunpack.c.l.s4 1983009808
        %v1874 = vunpack.c.0.s8 %v1873
        %v1875 = vlaneseq
        %v1876 = vshrl.u32 %v1875, 7
        %v1877 = vsub.s32 %v1874, %v1876
        %v1878 = vrot.slane %v1864, %v1877
        %v1879 = vcombine.low %v1855, %v1871
        %v1880 = vcombine.high %v1855, %v1871
        %v1882 = vunpack.c.l.s4 1934713408
        %v1883 = vunpack.c.0.s8 %v1882
        %v1884 = vlaneseq
        %v1885 = vshrl.u32 %v1884, 7
        %v1886 = vsub.s32 %v1883, %v1885
        %v1887 = vrot.slane %v1879, %v1886
        %v1889 = vunpack.c.l.s4 1934713408
        %v1890 = vunpack.c.0.s8 %v1889
        %v1891 = vlaneseq
        %v1892 = vshrl.u32 %v1891, 7
        %v1893 = vsub.s32 %v1890, %v1892
        %v1894 = vrot.slane %v1880, %v1893
        %v1895 = vcombine.low %v1862, %v1878
        %v1896 = vcombine.high %v1862, %v1878
        %v1898 = vunpack.c.l.s4 1934713408
        %v1899 = vunpack.c.0.s8 %v1898
        %v1900 = vlaneseq
        %v1901 = vshrl.u32 %v1900, 7
        %v1902 = vsub.s32 %v1899, %v1901
        %v1903 = vrot.slane %v1895, %v1902
        %v1905 = vunpack.c.l.s4 1934713408
        %v1906 = vunpack.c.0.s8 %v1905
        %v1907 = vlaneseq
        %v1908 = vshrl.u32 %v1907, 7
        %v1909 = vsub.s32 %v1906, %v1908
        %v1910 = vrot.slane %v1896, %v1909
        %v1911 = vcombine.high %v1887, 0.0
        %v1912 = vcombine.high %v1894, 0.0
        %v1913 = vcombine.high %v1903, 0.0
        %v1914 = vcombine.high %v1910, 0.0
        %v1915 = vcombine.low %v1826, %v1834
        %v1916 = vcombine.high %v1826, %v1834
        %v1918 = vunpack.c.l.s4 1983009808
        %v1919 = vunpack.c.0.s8 %v1918
        %v1920 = vlaneseq
        %v1921 = vshrl.u32 %v1920, 7
        %v1922 = vsub.s32 %v1919, %v1921
        %v1923 = vrot.slane %v1915, %v1922
        %v1925 = vunpack.c.l.s4 1983009808
        %v1926 = vunpack.c.0.s8 %v1925
        %v1927 = vlaneseq
        %v1928 = vshrl.u32 %v1927, 7
        %v1929 = vsub.s32 %v1926, %v1928
        %v1930 = vrot.slane %v1916, %v1929
        %v1931 = vcombine.low %v1830, %v1838
        %v1932 = vcombine.high %v1830, %v1838
        %v1934 = vunpack.c.l.s4 1983009808
        %v1935 = vunpack.c.0.s8 %v1934
        %v1936 = vlaneseq
        %v1937 = vshrl.u32 %v1936, 7
        %v1938 = vsub.s32 %v1935, %v1937
        %v1939 = vrot.slane %v1931, %v1938
        %v1941 = vunpack.c.l.s4 1983009808
        %v1942 = vunpack.c.0.s8 %v1941
        %v1943 = vlaneseq
        %v1944 = vshrl.u32 %v1943, 7
        %v1945 = vsub.s32 %v1942, %v1944
        %v1946 = vrot.slane %v1932, %v1945
        %v1947 = vcombine.low %v1923, %v1939
        %v1948 = vcombine.high %v1923, %v1939
        %v1950 = vunpack.c.l.s4 1934713408
        %v1951 = vunpack.c.0.s8 %v1950
        %v1952 = vlaneseq
        %v1953 = vshrl.u32 %v1952, 7
        %v1954 = vsub.s32 %v1951, %v1953
        %v1955 = vrot.slane %v1947, %v1954
        %v1957 = vunpack.c.l.s4 1934713408
        %v1958 = vunpack.c.0.s8 %v1957
        %v1959 = vlaneseq
        %v1960 = vshrl.u32 %v1959, 7
        %v1961 = vsub.s32 %v1958, %v1960
        %v1962 = vrot.slane %v1948, %v1961
        %v1963 = vcombine.low %v1930, %v1946
        %v1964 = vcombine.high %v1930, %v1946
        %v1966 = vunpack.c.l.s4 1934713408
        %v1967 = vunpack.c.0.s8 %v1966
        %v1968 = vlaneseq
        %v1969 = vshrl.u32 %v1968, 7
        %v1970 = vsub.s32 %v1967, %v1969
        %v1971 = vrot.slane %v1963, %v1970
        %v1973 = vunpack.c.l.s4 1934713408
        %v1974 = vunpack.c.0.s8 %v1973
        %v1975 = vlaneseq
        %v1976 = vshrl.u32 %v1975, 7
        %v1977 = vsub.s32 %v1974, %v1976
        %v1978 = vrot.slane %v1964, %v1977
        %v1979 = vcombine.high %v1955, 0.0
        %v1980 = vcombine.high %v1962, 0.0
        %v1981 = vcombine.high %v1971, 0.0
        %v1982 = vcombine.high %v1978, 0.0
        %1984 = vrot.lane.b32.xlu0 %v1911, 16
        %v1985 = vpop.permute.xlu0 %1984
        %1988 = vrot.lane.b32.xlu0 %v1894, 32
        %v1989 = vpop.permute.xlu0 %1988
        %1992 = vrot.lane.b32.xlu0 %v1912, 48
        %v1993 = vpop.permute.xlu0 %1992
        %1996 = vrot.lane.b32.xlu0 %v1903, 64
        %v1997 = vpop.permute.xlu0 %1996
        %2000 = vrot.lane.b32.xlu0 %v1913, 80
        %v2001 = vpop.permute.xlu0 %2000
        %2004 = vrot.lane.b32.xlu0 %v1910, 96
        %v2005 = vpop.permute.xlu0 %2004
        %2008 = vrot.lane.b32.xlu0 %v1914, 112
        %v2009 = vpop.permute.xlu0 %2008
        %2012 = vrot.lane.b32.xlu0 %v1979, 16
        %v2013 = vpop.permute.xlu0 %2012
        %2016 = vrot.lane.b32.xlu0 %v1962, 32
        %v2017 = vpop.permute.xlu0 %2016
        %2020 = vrot.lane.b32.xlu0 %v1980, 48
        %v2021 = vpop.permute.xlu0 %2020
        %2024 = vrot.lane.b32.xlu0 %v1971, 64
        %v2025 = vpop.permute.xlu0 %2024
        %2028 = vrot.lane.b32.xlu0 %v1981, 80
        %v2029 = vpop.permute.xlu0 %2028
        %2032 = vrot.lane.b32.xlu0 %v1978, 96
        %v2033 = vpop.permute.xlu0 %2032
        %2036 = vrot.lane.b32.xlu0 %v1982, 112
        %v2037 = vpop.permute.xlu0 %2036
        %v2039 = vsel %vm342, %v1887, %v1985
        %v2040 = vsel %vm344, %v2039, %v1989
        %v2041 = vsel %vm346, %v2040, %v1993
        %v2042 = vsel %vm348, %v2041, %v1997
        %v2043 = vsel %vm350, %v2042, %v2001
        %v2044 = vsel %vm352, %v2043, %v2005
        %v2045 = vsel %vm354, %v2044, %v2009
        %v2046 = vsel %vm342, %v1955, %v2013
        %v2047 = vsel %vm344, %v2046, %v2017
        %v2048 = vsel %vm346, %v2047, %v2021
        %v2049 = vsel %vm348, %v2048, %v2025
        %v2050 = vsel %vm350, %v2049, %v2029
        %v2051 = vsel %vm352, %v2050, %v2033
        %v2052 = vsel %vm354, %v2051, %v2037
        %v2055 = vrot.slane %v2045, 4
        %v2056 = vrot.slane %v2052, 4
        %2059 = vst [vmem:[#allocation2 + $0x30] sm:$0xf0] %v2055
        %2060 = vst [vmem:[#allocation2 + $0x38] sm:$0xf0] %v2056
        %v2061 = vld [vmem:[%s141 + $0x2] sm:$0xff]
        %v2062 = vld [vmem:[%s141 + $0xa] sm:$0xff]
        %v2063 = vld [vmem:[%s141 + $0x1a] sm:$0xff]
        %v2064 = vld [vmem:[%s141 + $0x22] sm:$0xff]
        %v2065 = vld [vmem:[%s141 + $0x32] sm:$0xff]
        %v2066 = vld [vmem:[%s141 + $0x3a] sm:$0xff]
        %v2067 = vld [vmem:[%s141 + $0x4a] sm:$0xff]
        %v2068 = vld [vmem:[%s141 + $0x52] sm:$0xff]
        %2077 = vrot.lane.b32.xlu0 %v2061, 126
        %v2078 = vpop.permute.xlu0 %2077
        %2079 = vrot.lane.b32.xlu0 %v2062, 126
        %v2080 = vpop.permute.xlu0 %2079
        %2081 = vrot.lane.b32.xlu0 %v2063, 126
        %v2082 = vpop.permute.xlu0 %2081
        %2083 = vrot.lane.b32.xlu0 %v2064, 126
        %v2084 = vpop.permute.xlu0 %2083
        %2085 = vrot.lane.b32.xlu0 %v2065, 126
        %v2086 = vpop.permute.xlu0 %2085
        %2087 = vrot.lane.b32.xlu0 %v2066, 126
        %v2088 = vpop.permute.xlu0 %2087
        %2089 = vrot.lane.b32.xlu0 %v2067, 126
        %v2090 = vpop.permute.xlu0 %2089
        %2091 = vrot.lane.b32.xlu0 %v2068, 126
        %v2092 = vpop.permute.xlu0 %2091
        %v2101 = vcombine.low %v2078, %v2086
        %v2102 = vcombine.high %v2078, %v2086
        %v2104 = vunpack.c.l.s4 1983009808
        %v2105 = vunpack.c.0.s8 %v2104
        %v2106 = vlaneseq
        %v2107 = vshrl.u32 %v2106, 7
        %v2108 = vsub.s32 %v2105, %v2107
        %v2109 = vrot.slane %v2101, %v2108
        %v2111 = vunpack.c.l.s4 1983009808
        %v2112 = vunpack.c.0.s8 %v2111
        %v2113 = vlaneseq
        %v2114 = vshrl.u32 %v2113, 7
        %v2115 = vsub.s32 %v2112, %v2114
        %v2116 = vrot.slane %v2102, %v2115
        %v2117 = vcombine.low %v2082, %v2090
        %v2118 = vcombine.high %v2082, %v2090
        %v2120 = vunpack.c.l.s4 1983009808
        %v2121 = vunpack.c.0.s8 %v2120
        %v2122 = vlaneseq
        %v2123 = vshrl.u32 %v2122, 7
        %v2124 = vsub.s32 %v2121, %v2123
        %v2125 = vrot.slane %v2117, %v2124
        %v2127 = vunpack.c.l.s4 1983009808
        %v2128 = vunpack.c.0.s8 %v2127
        %v2129 = vlaneseq
        %v2130 = vshrl.u32 %v2129, 7
        %v2131 = vsub.s32 %v2128, %v2130
        %v2132 = vrot.slane %v2118, %v2131
        %v2133 = vcombine.low %v2109, %v2125
        %v2134 = vcombine.high %v2109, %v2125
        %v2136 = vunpack.c.l.s4 1934713408
        %v2137 = vunpack.c.0.s8 %v2136
        %v2138 = vlaneseq
        %v2139 = vshrl.u32 %v2138, 7
        %v2140 = vsub.s32 %v2137, %v2139
        %v2141 = vrot.slane %v2133, %v2140
        %v2143 = vunpack.c.l.s4 1934713408
        %v2144 = vunpack.c.0.s8 %v2143
        %v2145 = vlaneseq
        %v2146 = vshrl.u32 %v2145, 7
        %v2147 = vsub.s32 %v2144, %v2146
        %v2148 = vrot.slane %v2134, %v2147
        %v2149 = vcombine.low %v2116, %v2132
        %v2150 = vcombine.high %v2116, %v2132
        %v2152 = vunpack.c.l.s4 1934713408
        %v2153 = vunpack.c.0.s8 %v2152
        %v2154 = vlaneseq
        %v2155 = vshrl.u32 %v2154, 7
        %v2156 = vsub.s32 %v2153, %v2155
        %v2157 = vrot.slane %v2149, %v2156
        %v2159 = vunpack.c.l.s4 1934713408
        %v2160 = vunpack.c.0.s8 %v2159
        %v2161 = vlaneseq
        %v2162 = vshrl.u32 %v2161, 7
        %v2163 = vsub.s32 %v2160, %v2162
        %v2164 = vrot.slane %v2150, %v2163
        %v2165 = vcombine.high %v2141, 0.0
        %v2166 = vcombine.high %v2148, 0.0
        %v2167 = vcombine.high %v2157, 0.0
        %v2168 = vcombine.high %v2164, 0.0
        %v2169 = vcombine.low %v2080, %v2088
        %v2170 = vcombine.high %v2080, %v2088
        %v2172 = vunpack.c.l.s4 1983009808
        %v2173 = vunpack.c.0.s8 %v2172
        %v2174 = vlaneseq
        %v2175 = vshrl.u32 %v2174, 7
        %v2176 = vsub.s32 %v2173, %v2175
        %v2177 = vrot.slane %v2169, %v2176
        %v2179 = vunpack.c.l.s4 1983009808
        %v2180 = vunpack.c.0.s8 %v2179
        %v2181 = vlaneseq
        %v2182 = vshrl.u32 %v2181, 7
        %v2183 = vsub.s32 %v2180, %v2182
        %v2184 = vrot.slane %v2170, %v2183
        %v2185 = vcombine.low %v2084, %v2092
        %v2186 = vcombine.high %v2084, %v2092
        %v2188 = vunpack.c.l.s4 1983009808
        %v2189 = vunpack.c.0.s8 %v2188
        %v2190 = vlaneseq
        %v2191 = vshrl.u32 %v2190, 7
        %v2192 = vsub.s32 %v2189, %v2191
        %v2193 = vrot.slane %v2185, %v2192
        %v2195 = vunpack.c.l.s4 1983009808
        %v2196 = vunpack.c.0.s8 %v2195
        %v2197 = vlaneseq
        %v2198 = vshrl.u32 %v2197, 7
        %v2199 = vsub.s32 %v2196, %v2198
        %v2200 = vrot.slane %v2186, %v2199
        %v2201 = vcombine.low %v2177, %v2193
        %v2202 = vcombine.high %v2177, %v2193
        %v2204 = vunpack.c.l.s4 1934713408
        %v2205 = vunpack.c.0.s8 %v2204
        %v2206 = vlaneseq
        %v2207 = vshrl.u32 %v2206, 7
        %v2208 = vsub.s32 %v2205, %v2207
        %v2209 = vrot.slane %v2201, %v2208
        %v2211 = vunpack.c.l.s4 1934713408
        %v2212 = vunpack.c.0.s8 %v2211
        %v2213 = vlaneseq
        %v2214 = vshrl.u32 %v2213, 7
        %v2215 = vsub.s32 %v2212, %v2214
        %v2216 = vrot.slane %v2202, %v2215
        %v2217 = vcombine.low %v2184, %v2200
        %v2218 = vcombine.high %v2184, %v2200
        %v2220 = vunpack.c.l.s4 1934713408
        %v2221 = vunpack.c.0.s8 %v2220
        %v2222 = vlaneseq
        %v2223 = vshrl.u32 %v2222, 7
        %v2224 = vsub.s32 %v2221, %v2223
        %v2225 = vrot.slane %v2217, %v2224
        %v2227 = vunpack.c.l.s4 1934713408
        %v2228 = vunpack.c.0.s8 %v2227
        %v2229 = vlaneseq
        %v2230 = vshrl.u32 %v2229, 7
        %v2231 = vsub.s32 %v2228, %v2230
        %v2232 = vrot.slane %v2218, %v2231
        %v2233 = vcombine.high %v2209, 0.0
        %v2234 = vcombine.high %v2216, 0.0
        %v2235 = vcombine.high %v2225, 0.0
        %v2236 = vcombine.high %v2232, 0.0
        %2238 = vrot.lane.b32.xlu0 %v2165, 16
        %v2239 = vpop.permute.xlu0 %2238
        %2242 = vrot.lane.b32.xlu0 %v2148, 32
        %v2243 = vpop.permute.xlu0 %2242
        %2246 = vrot.lane.b32.xlu0 %v2166, 48
        %v2247 = vpop.permute.xlu0 %2246
        %2250 = vrot.lane.b32.xlu0 %v2157, 64
        %v2251 = vpop.permute.xlu0 %2250
        %2254 = vrot.lane.b32.xlu0 %v2167, 80
        %v2255 = vpop.permute.xlu0 %2254
        %2258 = vrot.lane.b32.xlu0 %v2164, 96
        %v2259 = vpop.permute.xlu0 %2258
        %2262 = vrot.lane.b32.xlu0 %v2168, 112
        %v2263 = vpop.permute.xlu0 %2262
        %2266 = vrot.lane.b32.xlu0 %v2233, 16
        %v2267 = vpop.permute.xlu0 %2266
        %2270 = vrot.lane.b32.xlu0 %v2216, 32
        %v2271 = vpop.permute.xlu0 %2270
        %2274 = vrot.lane.b32.xlu0 %v2234, 48
        %v2275 = vpop.permute.xlu0 %2274
        %2278 = vrot.lane.b32.xlu0 %v2225, 64
        %v2279 = vpop.permute.xlu0 %2278
        %2282 = vrot.lane.b32.xlu0 %v2235, 80
        %v2283 = vpop.permute.xlu0 %2282
        %2286 = vrot.lane.b32.xlu0 %v2232, 96
        %v2287 = vpop.permute.xlu0 %2286
        %2290 = vrot.lane.b32.xlu0 %v2236, 112
        %v2291 = vpop.permute.xlu0 %2290
        %v2293 = vsel %vm342, %v2141, %v2239
        %v2294 = vsel %vm344, %v2293, %v2243
        %v2295 = vsel %vm346, %v2294, %v2247
        %v2296 = vsel %vm348, %v2295, %v2251
        %v2297 = vsel %vm350, %v2296, %v2255
        %v2298 = vsel %vm352, %v2297, %v2259
        %v2299 = vsel %vm354, %v2298, %v2263
        %v2300 = vsel %vm342, %v2209, %v2267
        %v2301 = vsel %vm344, %v2300, %v2271
        %v2302 = vsel %vm346, %v2301, %v2275
        %v2303 = vsel %vm348, %v2302, %v2279
        %v2304 = vsel %vm350, %v2303, %v2283
        %v2305 = vsel %vm352, %v2304, %v2287
        %v2306 = vsel %vm354, %v2305, %v2291
        %2307 = vst [vmem:[#allocation2 + $0x40] sm:$0xf] %v2299
        %2308 = vst [vmem:[#allocation2 + $0x48] sm:$0xf] %v2306
        %v2309 = vld [vmem:[%s1] sm:$0xff]
        %v2310 = vld [vmem:[#allocation2] sm:$0xff]
        %v2311 = vld [vmem:[#allocation2 + $0x8] sm:$0xff]
        %v2312 = vld [vmem:[#allocation2 + $0x10] sm:$0xff]
        %v2313 = vld [vmem:[#allocation2 + $0x18] sm:$0xff]
        %v2314 = vld [vmem:[#allocation2 + $0x20] sm:$0xff]
        %v2315 = vld [vmem:[#allocation2 + $0x28] sm:$0xff]
        %v2316 = vld [vmem:[#allocation2 + $0x30] sm:$0xff]
        %v2317 = vld [vmem:[#allocation2 + $0x38] sm:$0xff]
        %v2318 = vld [vmem:[#allocation2 + $0x40] sm:$0xf]
        %v2319 = vld [vmem:[#allocation2 + $0x48] sm:$0xf]
        %vm2320 = vcmask 293888
        %v2322 = vsel %vm2320, %v2309, 0
        %vm2324 = vcmask 1043456
        %v2326 = vsel %vm2324, %v2318, 0
        %v2329 = vsel %vm2324, %v2319, 0
        %v2331 = vand.u32 %v2311, 4294901760
        %2332 = vmatprep.subr.mxu0 %v2331
        %v2333 = vand.u32 %v2310, 4294901760
        %2334 = vmatpush1.msra.mxu0 %v2333
        %v2335 = vand.u32 %v2313, 4294901760
        %2336 = vmatprep.subr.mxu0 %v2335
        %v2337 = vand.u32 %v2312, 4294901760
        %2338 = vmatpush1.msra.mxu0 %v2337
        %v2339 = vand.u32 %v2315, 4294901760
        %2340 = vmatprep.subr.mxu0 %v2339
        %v2341 = vand.u32 %v2314, 4294901760
        %2342 = vmatpush1.msra.mxu0 %v2341
        %v2343 = vand.u32 %v2317, 4294901760
        %2344 = vmatprep.subr.mxu0 %v2343
        %v2345 = vand.u32 %v2316, 4294901760
        %2346 = vmatpush1.msra.mxu0 %v2345
        %v2347 = vand.u32 %v2329, 4294901760
        %2348 = vmatprep.subr.mxu0 %v2347
        %v2349 = vand.u32 %v2326, 4294901760
        %2350 = vmatpush1.msra.mxu0 %v2349
        %2351 = vmatprep.subr.mxu0 0.0
        %2352 = vmatpush1.msra.mxu0 0.0
        %2353 = vmatprep.subr.mxu0 0.0
        %2354 = vmatpush1.msra.mxu0 0.0
        %2355 = vmatprep.subr.mxu0 0.0
        %2356 = vmatpush1.msra.mxu0 0.0
        %2357 = vmatprep.subr.mxu0 0.0
        %2358 = vmatpush1.msra.mxu0 0.0
        %2359 = vmatprep.subr.mxu0 0.0
        %2360 = vmatpush1.msra.mxu0 0.0
        %2361 = vmatprep.subr.mxu0 0.0
        %2362 = vmatpush1.msra.mxu0 0.0
        %2363 = vmatprep.subr.mxu0 0.0
        %2364 = vmatpush1.msra.mxu0 0.0
        %2365 = vmatprep.subr.mxu0 0.0
        %2366 = vmatpush1.msra.mxu0 0.0
        %2367 = vmatprep.subr.mxu0 0.0
        %2368 = vmatpush1.msra.mxu0 0.0
        %2369 = vmatprep.subr.mxu0 0.0
        %2370 = vmatpush1.msra.mxu0 0.0
        %2371 = vmatprep.subr.mxu0 0.0
        %2372 = vmatpush1.msra.mxu0 0.0
        %2373 = vmatprep.subr.mxu0 0.0
        %2374 = vmatpush1.msra.mxu0 0.0
        %2375 = vmatprep.subr.mxu0 0.0
        %2376 = vmatpush1.msra.mxu0 0.0
        %2377 = vmatprep.subr.mxu0 0.0
        %2378 = vmatpush1.msra.mxu0 0.0
        %2379 = vmatprep.subr.mxu0 0.0
        %2380 = vmatpush1.msra.mxu0 0.0
        %2381 = vmatprep.subr.mxu0 0.0
        %2382 = vmatpush1.msra.mxu0 0.0
        %2383 = vmatprep.subr.mxu0 0.0
        %2384 = vmatpush1.msra.mxu0 0.0
        %2385 = vmatprep.subr.mxu0 0.0
        %2386 = vmatpush1.msra.mxu0 0.0
        %2387 = vmatprep.subr.mxu0 0.0
        %2388 = vmatpush1.msra.mxu0 0.0
        %2389 = vmatprep.subr.mxu0 0.0
        %2390 = vmatpush1.msra.mxu0 0.0
        %2391 = vmatprep.subr.mxu0 0.0
        %2392 = vmatpush1.msra.mxu0 0.0
        %2393 = vmatprep.subr.mxu0 0.0
        %2394 = vmatpush1.msra.mxu0 0.0
        %2395 = vmatprep.subr.mxu0 0.0
        %2396 = vmatpush1.msra.mxu0 0.0
        %2397 = vmatprep.subr.mxu0 0.0
        %2398 = vmatpush1.msra.mxu0 0.0
        %2399 = vmatprep.subr.mxu0 0.0
        %2400 = vmatpush1.msra.mxu0 0.0
        %2401 = vmatprep.subr.mxu0 0.0
        %2402 = vmatpush1.msra.mxu0 0.0
        %2403 = vmatprep.subr.mxu0 0.0
        %2404 = vmatpush1.msra.mxu0 0.0
        %2405 = vmatprep.mubr.f32.mxu0 0.0
        %v2406 = vand.u32 %v2322, 4294901760
        %v2407 = vsub.f32 %v2322, %v2406
        %v2408 = vand.u32 %v2407, 4294901760
        %v2409 = vsub.f32 %v2407, %v2408
        %v2410 = vand.u32 %v2409, 4294901760
        %2411 = vmatmul.mubr.f32.gmra.mrb[0].mxu0 %v2410
        %v2412 = vpop.f32.mrb[0].mxu0
        %v2413 = vadd.f32 0.0, %v2412
        %v2414 = vpop.f32.mrb[0].mxu0
        %v2415 = vadd.f32 0.0, %v2414
        %2416 = vdwg.mxu0
        %v2417 = vand.u32 %v2311, 4294901760
        %v2418 = vsub.f32 %v2311, %v2417
        %v2419 = vand.u32 %v2418, 4294901760
        %v2420 = vsub.f32 %v2418, %v2419
        %v2421 = vand.u32 %v2420, 4294901760
        %2422 = vmatprep.subr.mxu0 %v2421
        %v2423 = vand.u32 %v2310, 4294901760
        %v2424 = vsub.f32 %v2310, %v2423
        %v2425 = vand.u32 %v2424, 4294901760
        %v2426 = vsub.f32 %v2424, %v2425
        %v2427 = vand.u32 %v2426, 4294901760
        %2428 = vmatpush1.msra.mxu0 %v2427
        %v2429 = vand.u32 %v2313, 4294901760
        %v2430 = vsub.f32 %v2313, %v2429
        %v2431 = vand.u32 %v2430, 4294901760
        %v2432 = vsub.f32 %v2430, %v2431
        %v2433 = vand.u32 %v2432, 4294901760
        %2434 = vmatprep.subr.mxu0 %v2433
        %v2435 = vand.u32 %v2312, 4294901760
        %v2436 = vsub.f32 %v2312, %v2435
        %v2437 = vand.u32 %v2436, 4294901760
        %v2438 = vsub.f32 %v2436, %v2437
        %v2439 = vand.u32 %v2438, 4294901760
        %2440 = vmatpush1.msra.mxu0 %v2439
        %v2441 = vand.u32 %v2315, 4294901760
        %v2442 = vsub.f32 %v2315, %v2441
        %v2443 = vand.u32 %v2442, 4294901760
        %v2444 = vsub.f32 %v2442, %v2443
        %v2445 = vand.u32 %v2444, 4294901760
        %2446 = vmatprep.subr.mxu0 %v2445
        %v2447 = vand.u32 %v2314, 4294901760
        %v2448 = vsub.f32 %v2314, %v2447
        %v2449 = vand.u32 %v2448, 4294901760
        %v2450 = vsub.f32 %v2448, %v2449
        %v2451 = vand.u32 %v2450, 4294901760
        %2452 = vmatpush1.msra.mxu0 %v2451
        %v2453 = vand.u32 %v2317, 4294901760
        %v2454 = vsub.f32 %v2317, %v2453
        %v2455 = vand.u32 %v2454, 4294901760
        %v2456 = vsub.f32 %v2454, %v2455
        %v2457 = vand.u32 %v2456, 4294901760
        %2458 = vmatprep.subr.mxu0 %v2457
        %v2459 = vand.u32 %v2316, 4294901760
        %v2460 = vsub.f32 %v2316, %v2459
        %v2461 = vand.u32 %v2460, 4294901760
        %v2462 = vsub.f32 %v2460, %v2461
        %v2463 = vand.u32 %v2462, 4294901760
        %2464 = vmatpush1.msra.mxu0 %v2463
        %v2465 = vand.u32 %v2329, 4294901760
        %v2466 = vsub.f32 %v2329, %v2465
        %v2467 = vand.u32 %v2466, 4294901760
        %v2468 = vsub.f32 %v2466, %v2467
        %v2469 = vand.u32 %v2468, 4294901760
        %2470 = vmatprep.subr.mxu0 %v2469
        %v2471 = vand.u32 %v2326, 4294901760
        %v2472 = vsub.f32 %v2326, %v2471
        %v2473 = vand.u32 %v2472, 4294901760
        %v2474 = vsub.f32 %v2472, %v2473
        %v2475 = vand.u32 %v2474, 4294901760
        %2476 = vmatpush1.msra.mxu0 %v2475
        %2477 = vmatprep.subr.mxu0 0.0
        %2478 = vmatpush1.msra.mxu0 0.0
        %2479 = vmatprep.subr.mxu0 0.0
        %2480 = vmatpush1.msra.mxu0 0.0
        %2481 = vmatprep.subr.mxu0 0.0
        %2482 = vmatpush1.msra.mxu0 0.0
        %2483 = vmatprep.subr.mxu0 0.0
        %2484 = vmatpush1.msra.mxu0 0.0
        %2485 = vmatprep.subr.mxu0 0.0
        %2486 = vmatpush1.msra.mxu0 0.0
        %2487 = vmatprep.subr.mxu0 0.0
        %2488 = vmatpush1.msra.mxu0 0.0
        %2489 = vmatprep.subr.mxu0 0.0
        %2490 = vmatpush1.msra.mxu0 0.0
        %2491 = vmatprep.subr.mxu0 0.0
        %2492 = vmatpush1.msra.mxu0 0.0
        %2493 = vmatprep.subr.mxu0 0.0
        %2494 = vmatpush1.msra.mxu0 0.0
        %2495 = vmatprep.subr.mxu0 0.0
        %2496 = vmatpush1.msra.mxu0 0.0
        %2497 = vmatprep.subr.mxu0 0.0
        %2498 = vmatpush1.msra.mxu0 0.0
        %2499 = vmatprep.subr.mxu0 0.0
        %2500 = vmatpush1.msra.mxu0 0.0
        %2501 = vmatprep.subr.mxu0 0.0
        %2502 = vmatpush1.msra.mxu0 0.0
        %2503 = vmatprep.subr.mxu0 0.0
        %2504 = vmatpush1.msra.mxu0 0.0
        %2505 = vmatprep.subr.mxu0 0.0
        %2506 = vmatpush1.msra.mxu0 0.0
        %2507 = vmatprep.subr.mxu0 0.0
        %2508 = vmatpush1.msra.mxu0 0.0
        %2509 = vmatprep.subr.mxu0 0.0
        %2510 = vmatpush1.msra.mxu0 0.0
        %2511 = vmatprep.subr.mxu0 0.0
        %2512 = vmatpush1.msra.mxu0 0.0
        %2513 = vmatprep.subr.mxu0 0.0
        %2514 = vmatpush1.msra.mxu0 0.0
        %2515 = vmatprep.subr.mxu0 0.0
        %2516 = vmatpush1.msra.mxu0 0.0
        %2517 = vmatprep.subr.mxu0 0.0
        %2518 = vmatpush1.msra.mxu0 0.0
        %2519 = vmatprep.subr.mxu0 0.0
        %2520 = vmatpush1.msra.mxu0 0.0
        %2521 = vmatprep.subr.mxu0 0.0
        %2522 = vmatpush1.msra.mxu0 0.0
        %2523 = vmatprep.subr.mxu0 0.0
        %2524 = vmatpush1.msra.mxu0 0.0
        %2525 = vmatprep.subr.mxu0 0.0
        %2526 = vmatpush1.msra.mxu0 0.0
        %2527 = vmatprep.subr.mxu0 0.0
        %2528 = vmatpush1.msra.mxu0 0.0
        %2529 = vmatprep.subr.mxu0 0.0
        %2530 = vmatpush1.msra.mxu0 0.0
        %2531 = vmatprep.mubr.f32.mxu0 0.0
        %v2532 = vand.u32 %v2322, 4294901760
        %2533 = vmatmul.mubr.f32.gmra.mrb[0].mxu0 %v2532
        %v2534 = vpop.f32.mrb[0].mxu0
        %v2535 = vadd.f32 %v2413, %v2534
        %v2536 = vpop.f32.mrb[0].mxu0
        %v2537 = vadd.f32 %v2415, %v2536
        %2538 = vdwg.mxu0
        %v2539 = vand.u32 %v2311, 4294901760
        %v2540 = vsub.f32 %v2311, %v2539
        %2541 = vmatprep.subr.mxu0 %v2540
        %v2542 = vand.u32 %v2310, 4294901760
        %v2543 = vsub.f32 %v2310, %v2542
        %2544 = vmatpush1.msra.mxu0 %v2543
        %v2545 = vand.u32 %v2313, 4294901760
        %v2546 = vsub.f32 %v2313, %v2545
        %2547 = vmatprep.subr.mxu0 %v2546
        %v2548 = vand.u32 %v2312, 4294901760
        %v2549 = vsub.f32 %v2312, %v2548
        %2550 = vmatpush1.msra.mxu0 %v2549
        %v2551 = vand.u32 %v2315, 4294901760
        %v2552 = vsub.f32 %v2315, %v2551
        %2553 = vmatprep.subr.mxu0 %v2552
        %v2554 = vand.u32 %v2314, 4294901760
        %v2555 = vsub.f32 %v2314, %v2554
        %2556 = vmatpush1.msra.mxu0 %v2555
        %v2557 = vand.u32 %v2317, 4294901760
        %v2558 = vsub.f32 %v2317, %v2557
        %2559 = vmatprep.subr.mxu0 %v2558
        %v2560 = vand.u32 %v2316, 4294901760
        %v2561 = vsub.f32 %v2316, %v2560
        %2562 = vmatpush1.msra.mxu0 %v2561
        %v2563 = vand.u32 %v2329, 4294901760
        %v2564 = vsub.f32 %v2329, %v2563
        %2565 = vmatprep.subr.mxu0 %v2564
        %v2566 = vand.u32 %v2326, 4294901760
        %v2567 = vsub.f32 %v2326, %v2566
        %2568 = vmatpush1.msra.mxu0 %v2567
        %2569 = vmatprep.subr.mxu0 0.0
        %2570 = vmatpush1.msra.mxu0 0.0
        %2571 = vmatprep.subr.mxu0 0.0
        %2572 = vmatpush1.msra.mxu0 0.0
        %2573 = vmatprep.subr.mxu0 0.0
        %2574 = vmatpush1.msra.mxu0 0.0
        %2575 = vmatprep.subr.mxu0 0.0
        %2576 = vmatpush1.msra.mxu0 0.0
        %2577 = vmatprep.subr.mxu0 0.0
        %2578 = vmatpush1.msra.mxu0 0.0
        %2579 = vmatprep.subr.mxu0 0.0
        %2580 = vmatpush1.msra.mxu0 0.0
        %2581 = vmatprep.subr.mxu0 0.0
        %2582 = vmatpush1.msra.mxu0 0.0
        %2583 = vmatprep.subr.mxu0 0.0
        %2584 = vmatpush1.msra.mxu0 0.0
        %2585 = vmatprep.subr.mxu0 0.0
        %2586 = vmatpush1.msra.mxu0 0.0
        %2587 = vmatprep.subr.mxu0 0.0
        %2588 = vmatpush1.msra.mxu0 0.0
        %2589 = vmatprep.subr.mxu0 0.0
        %2590 = vmatpush1.msra.mxu0 0.0
        %2591 = vmatprep.subr.mxu0 0.0
        %2592 = vmatpush1.msra.mxu0 0.0
        %2593 = vmatprep.subr.mxu0 0.0
        %2594 = vmatpush1.msra.mxu0 0.0
        %2595 = vmatprep.subr.mxu0 0.0
        %2596 = vmatpush1.msra.mxu0 0.0
        %2597 = vmatprep.subr.mxu0 0.0
        %2598 = vmatpush1.msra.mxu0 0.0
        %2599 = vmatprep.subr.mxu0 0.0
        %2600 = vmatpush1.msra.mxu0 0.0
        %2601 = vmatprep.subr.mxu0 0.0
        %2602 = vmatpush1.msra.mxu0 0.0
        %2603 = vmatprep.subr.mxu0 0.0
        %2604 = vmatpush1.msra.mxu0 0.0
        %2605 = vmatprep.subr.mxu0 0.0
        %2606 = vmatpush1.msra.mxu0 0.0
        %2607 = vmatprep.subr.mxu0 0.0
        %2608 = vmatpush1.msra.mxu0 0.0
        %2609 = vmatprep.subr.mxu0 0.0
        %2610 = vmatpush1.msra.mxu0 0.0
        %2611 = vmatprep.subr.mxu0 0.0
        %2612 = vmatpush1.msra.mxu0 0.0
        %2613 = vmatprep.subr.mxu0 0.0
        %2614 = vmatpush1.msra.mxu0 0.0
        %2615 = vmatprep.subr.mxu0 0.0
        %2616 = vmatpush1.msra.mxu0 0.0
        %2617 = vmatprep.subr.mxu0 0.0
        %2618 = vmatpush1.msra.mxu0 0.0
        %2619 = vmatprep.subr.mxu0 0.0
        %2620 = vmatpush1.msra.mxu0 0.0
        %2621 = vmatprep.subr.mxu0 0.0
        %2622 = vmatpush1.msra.mxu0 0.0
        %2623 = vmatprep.mubr.f32.mxu0 0.0
        %v2624 = vand.u32 %v2322, 4294901760
        %v2625 = vsub.f32 %v2322, %v2624
        %2626 = vmatmul.mubr.f32.gmra.mrb[0].mxu0 %v2625
        %v2627 = vpop.f32.mrb[0].mxu0
        %v2628 = vadd.f32 %v2535, %v2627
        %v2629 = vpop.f32.mrb[0].mxu0
        %v2630 = vadd.f32 %v2537, %v2629
        %2631 = vdwg.mxu0
        %v2632 = vand.u32 %v2311, 4294901760
        %2633 = vmatprep.subr.mxu0 %v2632
        %v2634 = vand.u32 %v2310, 4294901760
        %2635 = vmatpush1.msra.mxu0 %v2634
        %v2636 = vand.u32 %v2313, 4294901760
        %2637 = vmatprep.subr.mxu0 %v2636
        %v2638 = vand.u32 %v2312, 4294901760
        %2639 = vmatpush1.msra.mxu0 %v2638
        %v2640 = vand.u32 %v2315, 4294901760
        %2641 = vmatprep.subr.mxu0 %v2640
        %v2642 = vand.u32 %v2314, 4294901760
        %2643 = vmatpush1.msra.mxu0 %v2642
        %v2644 = vand.u32 %v2317, 4294901760
        %2645 = vmatprep.subr.mxu0 %v2644
        %v2646 = vand.u32 %v2316, 4294901760
        %2647 = vmatpush1.msra.mxu0 %v2646
        %v2648 = vand.u32 %v2329, 4294901760
        %2649 = vmatprep.subr.mxu0 %v2648
        %v2650 = vand.u32 %v2326, 4294901760
        %2651 = vmatpush1.msra.mxu0 %v2650
        %2652 = vmatprep.subr.mxu0 0.0
        %2653 = vmatpush1.msra.mxu0 0.0
        %2654 = vmatprep.subr.mxu0 0.0
        %2655 = vmatpush1.msra.mxu0 0.0
        %2656 = vmatprep.subr.mxu0 0.0
        %2657 = vmatpush1.msra.mxu0 0.0
        %2658 = vmatprep.subr.mxu0 0.0
        %2659 = vmatpush1.msra.mxu0 0.0
        %2660 = vmatprep.subr.mxu0 0.0
        %2661 = vmatpush1.msra.mxu0 0.0
        %2662 = vmatprep.subr.mxu0 0.0
        %2663 = vmatpush1.msra.mxu0 0.0
        %2664 = vmatprep.subr.mxu0 0.0
        %2665 = vmatpush1.msra.mxu0 0.0
        %2666 = vmatprep.subr.mxu0 0.0
        %2667 = vmatpush1.msra.mxu0 0.0
        %2668 = vmatprep.subr.mxu0 0.0
        %2669 = vmatpush1.msra.mxu0 0.0
        %2670 = vmatprep.subr.mxu0 0.0
        %2671 = vmatpush1.msra.mxu0 0.0
        %2672 = vmatprep.subr.mxu0 0.0
        %2673 = vmatpush1.msra.mxu0 0.0
        %2674 = vmatprep.subr.mxu0 0.0
        %2675 = vmatpush1.msra.mxu0 0.0
        %2676 = vmatprep.subr.mxu0 0.0
        %2677 = vmatpush1.msra.mxu0 0.0
        %2678 = vmatprep.subr.mxu0 0.0
        %2679 = vmatpush1.msra.mxu0 0.0
        %2680 = vmatprep.subr.mxu0 0.0
        %2681 = vmatpush1.msra.mxu0 0.0
        %2682 = vmatprep.subr.mxu0 0.0
        %2683 = vmatpush1.msra.mxu0 0.0
        %2684 = vmatprep.subr.mxu0 0.0
        %2685 = vmatpush1.msra.mxu0 0.0
        %2686 = vmatprep.subr.mxu0 0.0
        %2687 = vmatpush1.msra.mxu0 0.0
        %2688 = vmatprep.subr.mxu0 0.0
        %2689 = vmatpush1.msra.mxu0 0.0
        %2690 = vmatprep.subr.mxu0 0.0
        %2691 = vmatpush1.msra.mxu0 0.0
        %2692 = vmatprep.subr.mxu0 0.0
        %2693 = vmatpush1.msra.mxu0 0.0
        %2694 = vmatprep.subr.mxu0 0.0
        %2695 = vmatpush1.msra.mxu0 0.0
        %2696 = vmatprep.subr.mxu0 0.0
        %2697 = vmatpush1.msra.mxu0 0.0
        %2698 = vmatprep.subr.mxu0 0.0
        %2699 = vmatpush1.msra.mxu0 0.0
        %2700 = vmatprep.subr.mxu0 0.0
        %2701 = vmatpush1.msra.mxu0 0.0
        %2702 = vmatprep.subr.mxu0 0.0
        %2703 = vmatpush1.msra.mxu0 0.0
        %2704 = vmatprep.subr.mxu0 0.0
        %2705 = vmatpush1.msra.mxu0 0.0
        %2706 = vmatprep.mubr.f32.mxu0 0.0
        %v2707 = vand.u32 %v2322, 4294901760
        %v2708 = vsub.f32 %v2322, %v2707
        %v2709 = vand.u32 %v2708, 4294901760
        %2710 = vmatmul.mubr.f32.gmra.mrb[0].mxu0 %v2709
        %v2711 = vpop.f32.mrb[0].mxu0
        %v2712 = vadd.f32 %v2628, %v2711
        %v2713 = vpop.f32.mrb[0].mxu0
        %v2714 = vadd.f32 %v2630, %v2713
        %2715 = vdwg.mxu0
        %v2716 = vand.u32 %v2311, 4294901760
        %v2717 = vsub.f32 %v2311, %v2716
        %v2718 = vand.u32 %v2717, 4294901760
        %2719 = vmatprep.subr.mxu0 %v2718
        %v2720 = vand.u32 %v2310, 4294901760
        %v2721 = vsub.f32 %v2310, %v2720
        %v2722 = vand.u32 %v2721, 4294901760
        %2723 = vmatpush1.msra.mxu0 %v2722
        %v2724 = vand.u32 %v2313, 4294901760
        %v2725 = vsub.f32 %v2313, %v2724
        %v2726 = vand.u32 %v2725, 4294901760
        %2727 = vmatprep.subr.mxu0 %v2726
        %v2728 = vand.u32 %v2312, 4294901760
        %v2729 = vsub.f32 %v2312, %v2728
        %v2730 = vand.u32 %v2729, 4294901760
        %2731 = vmatpush1.msra.mxu0 %v2730
        %v2732 = vand.u32 %v2315, 4294901760
        %v2733 = vsub.f32 %v2315, %v2732
        %v2734 = vand.u32 %v2733, 4294901760
        %2735 = vmatprep.subr.mxu0 %v2734
        %v2736 = vand.u32 %v2314, 4294901760
        %v2737 = vsub.f32 %v2314, %v2736
        %v2738 = vand.u32 %v2737, 4294901760
        %2739 = vmatpush1.msra.mxu0 %v2738
        %v2740 = vand.u32 %v2317, 4294901760
        %v2741 = vsub.f32 %v2317, %v2740
        %v2742 = vand.u32 %v2741, 4294901760
        %2743 = vmatprep.subr.mxu0 %v2742
        %v2744 = vand.u32 %v2316, 4294901760
        %v2745 = vsub.f32 %v2316, %v2744
        %v2746 = vand.u32 %v2745, 4294901760
        %2747 = vmatpush1.msra.mxu0 %v2746
        %v2748 = vand.u32 %v2329, 4294901760
        %v2749 = vsub.f32 %v2329, %v2748
        %v2750 = vand.u32 %v2749, 4294901760
        %2751 = vmatprep.subr.mxu0 %v2750
        %v2752 = vand.u32 %v2326, 4294901760
        %v2753 = vsub.f32 %v2326, %v2752
        %v2754 = vand.u32 %v2753, 4294901760
        %2755 = vmatpush1.msra.mxu0 %v2754
        %2756 = vmatprep.subr.mxu0 0.0
        %2757 = vmatpush1.msra.mxu0 0.0
        %2758 = vmatprep.subr.mxu0 0.0
        %2759 = vmatpush1.msra.mxu0 0.0
        %2760 = vmatprep.subr.mxu0 0.0
        %2761 = vmatpush1.msra.mxu0 0.0
        %2762 = vmatprep.subr.mxu0 0.0
        %2763 = vmatpush1.msra.mxu0 0.0
        %2764 = vmatprep.subr.mxu0 0.0
        %2765 = vmatpush1.msra.mxu0 0.0
        %2766 = vmatprep.subr.mxu0 0.0
        %2767 = vmatpush1.msra.mxu0 0.0
        %2768 = vmatprep.subr.mxu0 0.0
        %2769 = vmatpush1.msra.mxu0 0.0
        %2770 = vmatprep.subr.mxu0 0.0
        %2771 = vmatpush1.msra.mxu0 0.0
        %2772 = vmatprep.subr.mxu0 0.0
        %2773 = vmatpush1.msra.mxu0 0.0
        %2774 = vmatprep.subr.mxu0 0.0
        %2775 = vmatpush1.msra.mxu0 0.0
        %2776 = vmatprep.subr.mxu0 0.0
        %2777 = vmatpush1.msra.mxu0 0.0
        %2778 = vmatprep.subr.mxu0 0.0
        %2779 = vmatpush1.msra.mxu0 0.0
        %2780 = vmatprep.subr.mxu0 0.0
        %2781 = vmatpush1.msra.mxu0 0.0
        %2782 = vmatprep.subr.mxu0 0.0
        %2783 = vmatpush1.msra.mxu0 0.0
        %2784 = vmatprep.subr.mxu0 0.0
        %2785 = vmatpush1.msra.mxu0 0.0
        %2786 = vmatprep.subr.mxu0 0.0
        %2787 = vmatpush1.msra.mxu0 0.0
        %2788 = vmatprep.subr.mxu0 0.0
        %2789 = vmatpush1.msra.mxu0 0.0
        %2790 = vmatprep.subr.mxu0 0.0
        %2791 = vmatpush1.msra.mxu0 0.0
        %2792 = vmatprep.subr.mxu0 0.0
        %2793 = vmatpush1.msra.mxu0 0.0
        %2794 = vmatprep.subr.mxu0 0.0
        %2795 = vmatpush1.msra.mxu0 0.0
        %2796 = vmatprep.subr.mxu0 0.0
        %2797 = vmatpush1.msra.mxu0 0.0
        %2798 = vmatprep.subr.mxu0 0.0
        %2799 = vmatpush1.msra.mxu0 0.0
        %2800 = vmatprep.subr.mxu0 0.0
        %2801 = vmatpush1.msra.mxu0 0.0
        %2802 = vmatprep.subr.mxu0 0.0
        %2803 = vmatpush1.msra.mxu0 0.0
        %2804 = vmatprep.subr.mxu0 0.0
        %2805 = vmatpush1.msra.mxu0 0.0
        %2806 = vmatprep.subr.mxu0 0.0
        %2807 = vmatpush1.msra.mxu0 0.0
        %2808 = vmatprep.subr.mxu0 0.0
        %2809 = vmatpush1.msra.mxu0 0.0
        %2810 = vmatprep.mubr.f32.mxu0 0.0
        %v2811 = vand.u32 %v2322, 4294901760
        %2812 = vmatmul.mubr.f32.gmra.mrb[0].mxu0 %v2811
        %v2813 = vpop.f32.mrb[0].mxu0
        %v2814 = vadd.f32 %v2712, %v2813
        %v2815 = vpop.f32.mrb[0].mxu0
        %v2816 = vadd.f32 %v2714, %v2815
        %2817 = vdwg.mxu0
        %v2818 = vand.u32 %v2311, 4294901760
        %2819 = vmatprep.subr.mxu0 %v2818
        %v2820 = vand.u32 %v2310, 4294901760
        %2821 = vmatpush1.msra.mxu0 %v2820
        %v2822 = vand.u32 %v2313, 4294901760
        %2823 = vmatprep.subr.mxu0 %v2822
        %v2824 = vand.u32 %v2312, 4294901760
        %2825 = vmatpush1.msra.mxu0 %v2824
        %v2826 = vand.u32 %v2315, 4294901760
        %2827 = vmatprep.subr.mxu0 %v2826
        %v2828 = vand.u32 %v2314, 4294901760
        %2829 = vmatpush1.msra.mxu0 %v2828
        %v2830 = vand.u32 %v2317, 4294901760
        %2831 = vmatprep.subr.mxu0 %v2830
        %v2832 = vand.u32 %v2316, 4294901760
        %2833 = vmatpush1.msra.mxu0 %v2832
        %v2834 = vand.u32 %v2329, 4294901760
        %2835 = vmatprep.subr.mxu0 %v2834
        %v2836 = vand.u32 %v2326, 4294901760
        %2837 = vmatpush1.msra.mxu0 %v2836
        %2838 = vmatprep.subr.mxu0 0.0
        %2839 = vmatpush1.msra.mxu0 0.0
        %2840 = vmatprep.subr.mxu0 0.0
        %2841 = vmatpush1.msra.mxu0 0.0
        %2842 = vmatprep.subr.mxu0 0.0
        %2843 = vmatpush1.msra.mxu0 0.0
        %2844 = vmatprep.subr.mxu0 0.0
        %2845 = vmatpush1.msra.mxu0 0.0
        %2846 = vmatprep.subr.mxu0 0.0
        %2847 = vmatpush1.msra.mxu0 0.0
        %2848 = vmatprep.subr.mxu0 0.0
        %2849 = vmatpush1.msra.mxu0 0.0
        %2850 = vmatprep.subr.mxu0 0.0
        %2851 = vmatpush1.msra.mxu0 0.0
        %2852 = vmatprep.subr.mxu0 0.0
        %2853 = vmatpush1.msra.mxu0 0.0
        %2854 = vmatprep.subr.mxu0 0.0
        %2855 = vmatpush1.msra.mxu0 0.0
        %2856 = vmatprep.subr.mxu0 0.0
        %2857 = vmatpush1.msra.mxu0 0.0
        %2858 = vmatprep.subr.mxu0 0.0
        %2859 = vmatpush1.msra.mxu0 0.0
        %2860 = vmatprep.subr.mxu0 0.0
        %2861 = vmatpush1.msra.mxu0 0.0
        %2862 = vmatprep.subr.mxu0 0.0
        %2863 = vmatpush1.msra.mxu0 0.0
        %2864 = vmatprep.subr.mxu0 0.0
        %2865 = vmatpush1.msra.mxu0 0.0
        %2866 = vmatprep.subr.mxu0 0.0
        %2867 = vmatpush1.msra.mxu0 0.0
        %2868 = vmatprep.subr.mxu0 0.0
        %2869 = vmatpush1.msra.mxu0 0.0
        %2870 = vmatprep.subr.mxu0 0.0
        %2871 = vmatpush1.msra.mxu0 0.0
        %2872 = vmatprep.subr.mxu0 0.0
        %2873 = vmatpush1.msra.mxu0 0.0
        %2874 = vmatprep.subr.mxu0 0.0
        %2875 = vmatpush1.msra.mxu0 0.0
        %2876 = vmatprep.subr.mxu0 0.0
        %2877 = vmatpush1.msra.mxu0 0.0
        %2878 = vmatprep.subr.mxu0 0.0
        %2879 = vmatpush1.msra.mxu0 0.0
        %2880 = vmatprep.subr.mxu0 0.0
        %2881 = vmatpush1.msra.mxu0 0.0
        %2882 = vmatprep.subr.mxu0 0.0
        %2883 = vmatpush1.msra.mxu0 0.0
        %2884 = vmatprep.subr.mxu0 0.0
        %2885 = vmatpush1.msra.mxu0 0.0
        %2886 = vmatprep.subr.mxu0 0.0
        %2887 = vmatpush1.msra.mxu0 0.0
        %2888 = vmatprep.subr.mxu0 0.0
        %2889 = vmatpush1.msra.mxu0 0.0
        %2890 = vmatprep.subr.mxu0 0.0
        %2891 = vmatpush1.msra.mxu0 0.0
        %2892 = vmatprep.mubr.f32.mxu0 0.0
        %v2893 = vand.u32 %v2322, 4294901760
        %2894 = vmatmul.mubr.f32.gmra.mrb[0].mxu0 %v2893
        %v2895 = vpop.f32.mrb[0].mxu0
        %v2896 = vadd.f32 %v2814, %v2895
        %v2897 = vpop.f32.mrb[0].mxu0
        %v2898 = vadd.f32 %v2816, %v2897
        %2899 = vdwg.mxu0
        %2900 = vst [vmem:[%s136] sm:$0xff] %v2896
        %2901 = vst [vmem:[%s136 + $0x8] sm:$0xff] %v2898
        %s2902 = sand.u32 %s71, 1
        %s2903 = scalar_lea.sflag [#allocation4], %s2902
        %s2904 = sand.u32 %s71, 1
        %s2905 = smul.addr %s2904, 16
        %s2906 = scalar_lea.vmem [#allocation3], %s2905
        // Predicated region
        $region29: #{tpu_custom_call.1} parent=27 // pred_check
          %p2907 = pneg %p81
        $region30: #{tpu_custom_call.1} parent=27 // pred_check_branch
          %2909 = sbr.rel (%p2907) target = $region32
        $region31: #{tpu_custom_call.1} parent=27 // pred_region
          %s2911 = ssub.s32 256, 256
          %2912 = vsyncadd %s2903, %s2911
          %s2913 = smul.addr %s16, 2
          %s2914 = smul.addr %s2913, 128
          %s2915 = scalar_lea.hbm %s2, %s2914
          %s2917 = sshll.u32 %s2906, 4
          %s2918 = int_to_ptr.vmem [resolvable:$true] %s2917
          %2920 = dma.vmem_to_hbm [thread:$0]  %s2918, 256, %s2915, %s2903
        $region32: #{tpu_custom_call.1} parent=27 // pred_fallthru
          _
      $region28: #{tpu_custom_call.1} parent=5 // pred_fallthru
        _
      %p2921 = scmp.le.s32.totalorder 2, %s11
      // Predicated region
      $region33: #{tpu_custom_call.1} parent=5 // pred_check
        %p2922 = pneg %p2921
      $region34: #{tpu_custom_call.1} parent=5 // pred_check_branch
        %2924 = sbr.rel (%p2922) target = $region36
      $region35: #{tpu_custom_call.1} parent=5 // pred_region
        %s2925 = ssub.s32 %s11, 2
        // Predicated region
        $region37: #{tpu_custom_call.1} parent=35 // pred_check
          %p2926 = pneg %p87
        $region38: #{tpu_custom_call.1} parent=35 // pred_check_branch
          %2928 = sbr.rel (%p2926) target = $region40
        $region39: #{tpu_custom_call.1} parent=35 // pred_region
          %s2929 = sand.u32 %s72, 1
          %s2930 = scalar_lea.sflag [#allocation4], %s2929
          %s2931 = sand.u32 %s72, 1
          %s2932 = smul.addr %s2931, 16
          %s2933 = scalar_lea.vmem [#allocation3], %s2932
          %2934 = dma.done %s2930, 256
        $region40: #{tpu_custom_call.1} parent=35 // pred_fallthru
          _
      $region36: #{tpu_custom_call.1} parent=5 // pred_fallthru
        _
    $region6: #{tpu_custom_call.1} parent=1 // loop_footer
      %s15 = sadd.s32 1, %s11
    $region7: #{tpu_custom_call.1} parent=1 // loop_footer_branch
      %10 = sbr.rel target = $region3
    $region8: #{tpu_custom_call.1} parent=1 // loop_exit
      _
    %2935 = vsyncpa [#allocation4], 1
    %s2936 = scalar_lea.sflag [#allocation4], 1
    %2937 = vsyncpa %s2936, 1

</llo_original>
